<compile_context>
chip_gen: v5e
topology: v5e:2x2
jax: 0.10.0
libtpu: 0.0.40
codegen_flags: <defaults>
</compile_context>

<pallas_src>
import functools

import jax
import jax.numpy as jnp
from jax.experimental import pallas as pl
from jax.experimental.pallas import tpu as pltpu


# ----------------------------- fused LSTM + FC kernel -----------------------------
def lstm_fc_kernel(x_ref, wih_ref, whh_ref, b_ref, wfc_ref, bfc_ref, o_ref,
                   *, seq_len, hidden, pred_len):
    """
    x_ref   : (B, S, E)   VMEM
    wih_ref : (E, 4H)     VMEM   (transposed torch weight_ih_l0)
    whh_ref : (H, 4H)     VMEM   (transposed torch weight_hh_l0)
    b_ref   : (1, 4H)     VMEM   (b_ih + b_hh)
    wfc_ref : (P, S)      SMEM   (torch fc.weight)
    bfc_ref : (P,)        SMEM   (torch fc.bias)
    o_ref   : (B, P, H)   VMEM
    """
    B = x_ref.shape[0]
    S, H, P = seq_len, hidden, pred_len

    wih = wih_ref[...]                       # (E, 4H), loaded once
    whh = whh_ref[...]                       # (H, 4H)
    bias = b_ref[...]                        # (1, 4H)

    h = jnp.zeros((B, H), jnp.float32)
    c = jnp.zeros((B, H), jnp.float32)
    acc = [jnp.zeros((B, H), jnp.float32) for _ in range(P)]   # fc accumulators

    # Static, fully unrolled recurrence (S is small); everything stays on-chip.
    for t in range(S):
        x_t = x_ref[:, t, :]                                   # (B, E), static slice
        gates = (jnp.dot(x_t, wih, preferred_element_type=jnp.float32)
                 + jnp.dot(h, whh, preferred_element_type=jnp.float32)
                 + bias)                                       # (B, 4H)

        # One sigmoid + one tanh over the full 4H-lane vreg (EUP), then slice.
        sig = jax.nn.sigmoid(gates)
        tnh = jnp.tanh(gates)
        i_g = sig[:, 0 * H:1 * H]
        f_g = sig[:, 1 * H:2 * H]
        g_g = tnh[:, 2 * H:3 * H]
        o_g = sig[:, 3 * H:4 * H]

        c = f_g * c + i_g * g_g
        h = o_g * jnp.tanh(c)

        # Fused Linear-over-time: y[:, p, :] += w_fc[p, t] * h_t  (VPU FMA,
        # scalar coefficient read from SMEM — no MXU, no h-sequence buffer).
        for p in range(P):
            acc[p] = acc[p] + wfc_ref[p, t] * h

    for p in range(P):
        o_ref[:, p, :] = (acc[p] + bfc_ref[p]).astype(o_ref.dtype)


def fused_lstm_fc(x, w_ih_t, w_hh_t, b_row, w_fc, b_fc):
    """x: (B, S, E). Returns (B, P, H) with H == E."""
    B, S, E = x.shape
    H = w_hh_t.shape[0]
    P = w_fc.shape[0]
    kernel = functools.partial(lstm_fc_kernel, seq_len=S, hidden=H, pred_len=P)
    return pl.pallas_call(
        kernel,
        out_shape=jax.ShapeDtypeStruct((B, P, H), jnp.float32),
        in_specs=[
            pl.BlockSpec(memory_space=pltpu.MemorySpace.VMEM),   # x
            pl.BlockSpec(memory_space=pltpu.MemorySpace.VMEM),   # w_ih_t
            pl.BlockSpec(memory_space=pltpu.MemorySpace.VMEM),   # w_hh_t
            pl.BlockSpec(memory_space=pltpu.MemorySpace.VMEM),   # b_row
            pl.BlockSpec(memory_space=pltpu.MemorySpace.SMEM),   # w_fc (scalar table)
            pl.BlockSpec(memory_space=pltpu.MemorySpace.SMEM),   # b_fc (scalar table)
        ],
        out_specs=pl.BlockSpec(memory_space=pltpu.MemorySpace.VMEM),
    )(x, w_ih_t, w_hh_t, b_row, w_fc, b_fc)


# ----------------------------- full model forward -----------------------------
@functools.partial(jax.jit, static_argnames=("pred_len",))
def model_forward(x, params, pred_len):
    # x: (B, S, E) — fed directly to the fused kernel, no transposes.
    y = fused_lstm_fc(x, params["w_ih_t"], params["w_hh_t"], params["b_row"],
                      params["w_fc"], params["b_fc"])          # (B, P, E)
    return y[:, -pred_len:, :]                                 # no-op (time dim already P)


# ----------------------------- pure-JAX reference -----------------------------
def reference_forward(x, params, pred_len):
    w_ih_t, w_hh_t, b_row = params["w_ih_t"], params["w_hh_t"], params["b_row"]
    H = w_hh_t.shape[0]
    x_sbe = jnp.transpose(x, (1, 0, 2))                        # (S, B, E)

    def step(carry, x_t):
        h, c = carry
        gates = x_t @ w_ih_t + h @ w_hh_t + b_row
        i_g = jax.nn.sigmoid(gates[:, 0 * H:1 * H])
        f_g = jax.nn.sigmoid(gates[:, 1 * H:2 * H])
        g_g = jnp.tanh(gates[:, 2 * H:3 * H])
        o_g = jax.nn.sigmoid(gates[:, 3 * H:4 * H])
        c_n = f_g * c + i_g * g_g
        h_n = o_g * jnp.tanh(c_n)
        return (h_n, c_n), h_n

    B = x.shape[0]
    h0 = jnp.zeros((B, H), jnp.float32)
    _, hs = jax.lax.scan(step, (h0, h0), x_sbe)                # (S, B, H)
    h_bse = jnp.transpose(hs, (1, 0, 2))                       # (B, S, H)
    y = jnp.einsum("ps,bsh->bph", params["w_fc"], h_bse) + params["b_fc"][None, :, None]
    return y[:, -pred_len:, :]


if __name__ == "__main__":
    # configs: seq_len=8, pred_len=4, enc_in=32 (hidden == enc_in for nn.LSTM(enc_in, enc_in))
    B, S, P, E = 2, 8, 4, 32
    H = E

    key = jax.random.PRNGKey(0)
    k_x, k1, k2, k3, k4, k5, k6 = jax.random.split(key, 7)

    x = jax.random.normal(k_x, (B, S, E), dtype=jnp.float32)

    # deterministic parameter init (uniform, PyTorch-style ranges)
    bound = 1.0 / jnp.sqrt(jnp.float32(H))
    w_ih = jax.random.uniform(k1, (4 * H, E), jnp.float32, -bound, bound)   # torch weight_ih_l0
    w_hh = jax.random.uniform(k2, (4 * H, H), jnp.float32, -bound, bound)   # torch weight_hh_l0
    b_ih = jax.random.uniform(k3, (4 * H,), jnp.float32, -bound, bound)
    b_hh = jax.random.uniform(k4, (4 * H,), jnp.float32, -bound, bound)
    fc_bound = 1.0 / jnp.sqrt(jnp.float32(S))
    w_fc = jax.random.uniform(k5, (P, S), jnp.float32, -fc_bound, fc_bound)  # Linear(S -> P)
    b_fc = jax.random.uniform(k6, (P,), jnp.float32, -fc_bound, fc_bound)

    params = {
        "w_ih_t": w_ih.T,                      # (E, 4H)
        "w_hh_t": w_hh.T,                      # (H, 4H)
        "b_row": (b_ih + b_hh)[None, :],       # (1, 4H)
        "w_fc": w_fc,                          # (P, S)
        "b_fc": b_fc,                          # (P,)
    }

    out = model_forward(x, params, P)
    out = jax.block_until_ready(out)

    ref = reference_forward(x, params, P)
    assert out.shape == (B, P, E), out.shape
    assert jnp.allclose(out, ref, atol=3e-5, rtol=3e-5), float(jnp.max(jnp.abs(out - ref)))

    print("KERNEL_OK")
</pallas_src>

<mosaic_0001>
module attributes {stable_mosaic.version = 11 : i64} {
  func.func @lstm_fc_kernel(%arg0: memref<2x8x32xf32, #tpu.memory_space<vmem>>, %arg1: memref<32x128xf32, #tpu.memory_space<vmem>>, %arg2: memref<32x128xf32, #tpu.memory_space<vmem>>, %arg3: memref<1x128xf32, #tpu.memory_space<vmem>>, %arg4: memref<4x8xf32, #tpu.memory_space<smem>>, %arg5: memref<4xf32, #tpu.memory_space<smem>>, %arg6: memref<2x4x32xf32, #tpu.memory_space<vmem>>) attributes {dimension_semantics = [], scalar_prefetch = 0 : i64, scratch_operands = 0 : i64, tpu.core_type = #tpu.core_type<tc>} {
    %c0 = arith.constant 0 : index
    %c0_0 = arith.constant 0 : index
    %0 = vector.load %arg1[%c0, %c0_0] : memref<32x128xf32, #tpu.memory_space<vmem>>, vector<32x128xf32>
    %c0_1 = arith.constant 0 : index
    %c0_2 = arith.constant 0 : index
    %1 = vector.load %arg2[%c0_1, %c0_2] : memref<32x128xf32, #tpu.memory_space<vmem>>, vector<32x128xf32>
    %c0_3 = arith.constant 0 : index
    %c0_4 = arith.constant 0 : index
    %2 = vector.load %arg3[%c0_3, %c0_4] : memref<1x128xf32, #tpu.memory_space<vmem>>, vector<1x128xf32>
    %cst = arith.constant 0.000000e+00 : f32
    %3 = vector.broadcast %cst : f32 to vector<2x32xf32>
    %cst_5 = arith.constant 0.000000e+00 : f32
    %4 = vector.broadcast %cst_5 : f32 to vector<2x32xf32>
    %cst_6 = arith.constant 0.000000e+00 : f32
    %5 = vector.broadcast %cst_6 : f32 to vector<2x32xf32>
    %cst_7 = arith.constant 0.000000e+00 : f32
    %6 = vector.broadcast %cst_7 : f32 to vector<2x32xf32>
    %cst_8 = arith.constant 0.000000e+00 : f32
    %7 = vector.broadcast %cst_8 : f32 to vector<2x32xf32>
    %cst_9 = arith.constant 0.000000e+00 : f32
    %8 = vector.broadcast %cst_9 : f32 to vector<2x32xf32>
    %c0_10 = arith.constant 0 : index
    %c0_11 = arith.constant 0 : index
    %c0_12 = arith.constant 0 : index
    %9 = vector.load %arg0[%c0_10, %c0_11, %c0_12] : memref<2x8x32xf32, #tpu.memory_space<vmem>>, vector<2x1x32xf32>
    %10 = vector.shape_cast %9 : vector<2x1x32xf32> to vector<2x32xf32>
    %cst_13 = arith.constant dense<0.000000e+00> : vector<2x128xf32>
    %11 = tpu.matmul %10, %0, %cst_13 {dimension_numbers = #tpu.dot_dimension_numbers<[1], [0], [0], [1], [0, 0, 1, 1], [], []>} : vector<2x32xf32>, vector<32x128xf32>, vector<2x128xf32> -> vector<2x128xf32>
    %cst_14 = arith.constant dense<0.000000e+00> : vector<2x128xf32>
    %12 = tpu.matmul %3, %1, %cst_14 {dimension_numbers = #tpu.dot_dimension_numbers<[1], [0], [0], [1], [0, 0, 1, 1], [], []>} : vector<2x32xf32>, vector<32x128xf32>, vector<2x128xf32> -> vector<2x128xf32>
    %13 = arith.addf %11, %12 : vector<2x128xf32>
    %14 = vector.broadcast %2 : vector<1x128xf32> to vector<2x128xf32>
    %15 = arith.addf %13, %14 : vector<2x128xf32>
    %16 = arith.negf %15 : vector<2x128xf32>
    %17 = math.exp %16 : vector<2x128xf32>
    %cst_15 = arith.constant 1.000000e+00 : f32
    %18 = vector.broadcast %cst_15 : f32 to vector<2x128xf32>
    %19 = arith.addf %18, %17 : vector<2x128xf32>
    %20 = arith.divf %18, %19 : vector<2x128xf32>
    %21 = math.tanh %15 : vector<2x128xf32>
    %22 = vector.extract_strided_slice %20 {offsets = [0, 0], sizes = [2, 32], strides = [1, 1]} : vector<2x128xf32> to vector<2x32xf32>
    %23 = vector.extract_strided_slice %20 {offsets = [0, 32], sizes = [2, 32], strides = [1, 1]} : vector<2x128xf32> to vector<2x32xf32>
    %24 = vector.extract_strided_slice %21 {offsets = [0, 64], sizes = [2, 32], strides = [1, 1]} : vector<2x128xf32> to vector<2x32xf32>
    %25 = vector.extract_strided_slice %20 {offsets = [0, 96], sizes = [2, 32], strides = [1, 1]} : vector<2x128xf32> to vector<2x32xf32>
    %26 = arith.mulf %23, %4 : vector<2x32xf32>
    %27 = arith.mulf %22, %24 : vector<2x32xf32>
    %28 = arith.addf %26, %27 : vector<2x32xf32>
    %29 = math.tanh %28 : vector<2x32xf32>
    %30 = arith.mulf %25, %29 : vector<2x32xf32>
    %c0_16 = arith.constant 0 : index
    %c0_17 = arith.constant 0 : index
    %31 = memref.load %arg4[%c0_16, %c0_17] : memref<4x8xf32, #tpu.memory_space<smem>>
    %32 = vector.broadcast %31 : f32 to vector<2x32xf32>
    %33 = arith.mulf %32, %30 : vector<2x32xf32>
    %34 = arith.addf %5, %33 : vector<2x32xf32>
    %c1 = arith.constant 1 : index
    %c0_18 = arith.constant 0 : index
    %35 = memref.load %arg4[%c1, %c0_18] : memref<4x8xf32, #tpu.memory_space<smem>>
    %36 = vector.broadcast %35 : f32 to vector<2x32xf32>
    %37 = arith.mulf %36, %30 : vector<2x32xf32>
    %38 = arith.addf %6, %37 : vector<2x32xf32>
    %c2 = arith.constant 2 : index
    %c0_19 = arith.constant 0 : index
    %39 = memref.load %arg4[%c2, %c0_19] : memref<4x8xf32, #tpu.memory_space<smem>>
    %40 = vector.broadcast %39 : f32 to vector<2x32xf32>
    %41 = arith.mulf %40, %30 : vector<2x32xf32>
    %42 = arith.addf %7, %41 : vector<2x32xf32>
    %c3 = arith.constant 3 : index
    %c0_20 = arith.constant 0 : index
    %43 = memref.load %arg4[%c3, %c0_20] : memref<4x8xf32, #tpu.memory_space<smem>>
    %44 = vector.broadcast %43 : f32 to vector<2x32xf32>
    %45 = arith.mulf %44, %30 : vector<2x32xf32>
    %46 = arith.addf %8, %45 : vector<2x32xf32>
    %c0_21 = arith.constant 0 : index
    %c1_22 = arith.constant 1 : index
    %c0_23 = arith.constant 0 : index
    %47 = vector.load %arg0[%c0_21, %c1_22, %c0_23] : memref<2x8x32xf32, #tpu.memory_space<vmem>>, vector<2x1x32xf32>
    %48 = vector.shape_cast %47 : vector<2x1x32xf32> to vector<2x32xf32>
    %cst_24 = arith.constant dense<0.000000e+00> : vector<2x128xf32>
    %49 = tpu.matmul %48, %0, %cst_24 {dimension_numbers = #tpu.dot_dimension_numbers<[1], [0], [0], [1], [0, 0, 1, 1], [], []>} : vector<2x32xf32>, vector<32x128xf32>, vector<2x128xf32> -> vector<2x128xf32>
    %cst_25 = arith.constant dense<0.000000e+00> : vector<2x128xf32>
    %50 = tpu.matmul %30, %1, %cst_25 {dimension_numbers = #tpu.dot_dimension_numbers<[1], [0], [0], [1], [0, 0, 1, 1], [], []>} : vector<2x32xf32>, vector<32x128xf32>, vector<2x128xf32> -> vector<2x128xf32>
    %51 = arith.addf %49, %50 : vector<2x128xf32>
    %52 = vector.broadcast %2 : vector<1x128xf32> to vector<2x128xf32>
    %53 = arith.addf %51, %52 : vector<2x128xf32>
    %54 = arith.negf %53 : vector<2x128xf32>
    %55 = math.exp %54 : vector<2x128xf32>
    %cst_26 = arith.constant 1.000000e+00 : f32
    %56 = vector.broadcast %cst_26 : f32 to vector<2x128xf32>
    %57 = arith.addf %56, %55 : vector<2x128xf32>
    %58 = arith.divf %56, %57 : vector<2x128xf32>
    %59 = math.tanh %53 : vector<2x128xf32>
    %60 = vector.extract_strided_slice %58 {offsets = [0, 0], sizes = [2, 32], strides = [1, 1]} : vector<2x128xf32> to vector<2x32xf32>
    %61 = vector.extract_strided_slice %58 {offsets = [0, 32], sizes = [2, 32], strides = [1, 1]} : vector<2x128xf32> to vector<2x32xf32>
    %62 = vector.extract_strided_slice %59 {offsets = [0, 64], sizes = [2, 32], strides = [1, 1]} : vector<2x128xf32> to vector<2x32xf32>
    %63 = vector.extract_strided_slice %58 {offsets = [0, 96], sizes = [2, 32], strides = [1, 1]} : vector<2x128xf32> to vector<2x32xf32>
    %64 = arith.mulf %61, %28 : vector<2x32xf32>
    %65 = arith.mulf %60, %62 : vector<2x32xf32>
    %66 = arith.addf %64, %65 : vector<2x32xf32>
    %67 = math.tanh %66 : vector<2x32xf32>
    %68 = arith.mulf %63, %67 : vector<2x32xf32>
    %c0_27 = arith.constant 0 : index
    %c1_28 = arith.constant 1 : index
    %69 = memref.load %arg4[%c0_27, %c1_28] : memref<4x8xf32, #tpu.memory_space<smem>>
    %70 = vector.broadcast %69 : f32 to vector<2x32xf32>
    %71 = arith.mulf %70, %68 : vector<2x32xf32>
    %72 = arith.addf %34, %71 : vector<2x32xf32>
    %c1_29 = arith.constant 1 : index
    %c1_30 = arith.constant 1 : index
    %73 = memref.load %arg4[%c1_29, %c1_30] : memref<4x8xf32, #tpu.memory_space<smem>>
    %74 = vector.broadcast %73 : f32 to vector<2x32xf32>
    %75 = arith.mulf %74, %68 : vector<2x32xf32>
    %76 = arith.addf %38, %75 : vector<2x32xf32>
    %c2_31 = arith.constant 2 : index
    %c1_32 = arith.constant 1 : index
    %77 = memref.load %arg4[%c2_31, %c1_32] : memref<4x8xf32, #tpu.memory_space<smem>>
    %78 = vector.broadcast %77 : f32 to vector<2x32xf32>
    %79 = arith.mulf %78, %68 : vector<2x32xf32>
    %80 = arith.addf %42, %79 : vector<2x32xf32>
    %c3_33 = arith.constant 3 : index
    %c1_34 = arith.constant 1 : index
    %81 = memref.load %arg4[%c3_33, %c1_34] : memref<4x8xf32, #tpu.memory_space<smem>>
    %82 = vector.broadcast %81 : f32 to vector<2x32xf32>
    %83 = arith.mulf %82, %68 : vector<2x32xf32>
    %84 = arith.addf %46, %83 : vector<2x32xf32>
    %c0_35 = arith.constant 0 : index
    %c2_36 = arith.constant 2 : index
    %c0_37 = arith.constant 0 : index
    %85 = vector.load %arg0[%c0_35, %c2_36, %c0_37] : memref<2x8x32xf32, #tpu.memory_space<vmem>>, vector<2x1x32xf32>
    %86 = vector.shape_cast %85 : vector<2x1x32xf32> to vector<2x32xf32>
    %cst_38 = arith.constant dense<0.000000e+00> : vector<2x128xf32>
    %87 = tpu.matmul %86, %0, %cst_38 {dimension_numbers = #tpu.dot_dimension_numbers<[1], [0], [0], [1], [0, 0, 1, 1], [], []>} : vector<2x32xf32>, vector<32x128xf32>, vector<2x128xf32> -> vector<2x128xf32>
    %cst_39 = arith.constant dense<0.000000e+00> : vector<2x128xf32>
    %88 = tpu.matmul %68, %1, %cst_39 {dimension_numbers = #tpu.dot_dimension_numbers<[1], [0], [0], [1], [0, 0, 1, 1], [], []>} : vector<2x32xf32>, vector<32x128xf32>, vector<2x128xf32> -> vector<2x128xf32>
    %89 = arith.addf %87, %88 : vector<2x128xf32>
    %90 = vector.broadcast %2 : vector<1x128xf32> to vector<2x128xf32>
    %91 = arith.addf %89, %90 : vector<2x128xf32>
    %92 = arith.negf %91 : vector<2x128xf32>
    %93 = math.exp %92 : vector<2x128xf32>
    %cst_40 = arith.constant 1.000000e+00 : f32
    %94 = vector.broadcast %cst_40 : f32 to vector<2x128xf32>
    %95 = arith.addf %94, %93 : vector<2x128xf32>
    %96 = arith.divf %94, %95 : vector<2x128xf32>
    %97 = math.tanh %91 : vector<2x128xf32>
    %98 = vector.extract_strided_slice %96 {offsets = [0, 0], sizes = [2, 32], strides = [1, 1]} : vector<2x128xf32> to vector<2x32xf32>
    %99 = vector.extract_strided_slice %96 {offsets = [0, 32], sizes = [2, 32], strides = [1, 1]} : vector<2x128xf32> to vector<2x32xf32>
    %100 = vector.extract_strided_slice %97 {offsets = [0, 64], sizes = [2, 32], strides = [1, 1]} : vector<2x128xf32> to vector<2x32xf32>
    %101 = vector.extract_strided_slice %96 {offsets = [0, 96], sizes = [2, 32], strides = [1, 1]} : vector<2x128xf32> to vector<2x32xf32>
    %102 = arith.mulf %99, %66 : vector<2x32xf32>
    %103 = arith.mulf %98, %100 : vector<2x32xf32>
    %104 = arith.addf %102, %103 : vector<2x32xf32>
    %105 = math.tanh %104 : vector<2x32xf32>
    %106 = arith.mulf %101, %105 : vector<2x32xf32>
    %c0_41 = arith.constant 0 : index
    %c2_42 = arith.constant 2 : index
    %107 = memref.load %arg4[%c0_41, %c2_42] : memref<4x8xf32, #tpu.memory_space<smem>>
    %108 = vector.broadcast %107 : f32 to vector<2x32xf32>
    %109 = arith.mulf %108, %106 : vector<2x32xf32>
    %110 = arith.addf %72, %109 : vector<2x32xf32>
    %c1_43 = arith.constant 1 : index
    %c2_44 = arith.constant 2 : index
    %111 = memref.load %arg4[%c1_43, %c2_44] : memref<4x8xf32, #tpu.memory_space<smem>>
    %112 = vector.broadcast %111 : f32 to vector<2x32xf32>
    %113 = arith.mulf %112, %106 : vector<2x32xf32>
    %114 = arith.addf %76, %113 : vector<2x32xf32>
    %c2_45 = arith.constant 2 : index
    %c2_46 = arith.constant 2 : index
    %115 = memref.load %arg4[%c2_45, %c2_46] : memref<4x8xf32, #tpu.memory_space<smem>>
    %116 = vector.broadcast %115 : f32 to vector<2x32xf32>
    %117 = arith.mulf %116, %106 : vector<2x32xf32>
    %118 = arith.addf %80, %117 : vector<2x32xf32>
    %c3_47 = arith.constant 3 : index
    %c2_48 = arith.constant 2 : index
    %119 = memref.load %arg4[%c3_47, %c2_48] : memref<4x8xf32, #tpu.memory_space<smem>>
    %120 = vector.broadcast %119 : f32 to vector<2x32xf32>
    %121 = arith.mulf %120, %106 : vector<2x32xf32>
    %122 = arith.addf %84, %121 : vector<2x32xf32>
    %c0_49 = arith.constant 0 : index
    %c3_50 = arith.constant 3 : index
    %c0_51 = arith.constant 0 : index
    %123 = vector.load %arg0[%c0_49, %c3_50, %c0_51] : memref<2x8x32xf32, #tpu.memory_space<vmem>>, vector<2x1x32xf32>
    %124 = vector.shape_cast %123 : vector<2x1x32xf32> to vector<2x32xf32>
    %cst_52 = arith.constant dense<0.000000e+00> : vector<2x128xf32>
    %125 = tpu.matmul %124, %0, %cst_52 {dimension_numbers = #tpu.dot_dimension_numbers<[1], [0], [0], [1], [0, 0, 1, 1], [], []>} : vector<2x32xf32>, vector<32x128xf32>, vector<2x128xf32> -> vector<2x128xf32>
    %cst_53 = arith.constant dense<0.000000e+00> : vector<2x128xf32>
    %126 = tpu.matmul %106, %1, %cst_53 {dimension_numbers = #tpu.dot_dimension_numbers<[1], [0], [0], [1], [0, 0, 1, 1], [], []>} : vector<2x32xf32>, vector<32x128xf32>, vector<2x128xf32> -> vector<2x128xf32>
    %127 = arith.addf %125, %126 : vector<2x128xf32>
    %128 = vector.broadcast %2 : vector<1x128xf32> to vector<2x128xf32>
    %129 = arith.addf %127, %128 : vector<2x128xf32>
    %130 = arith.negf %129 : vector<2x128xf32>
    %131 = math.exp %130 : vector<2x128xf32>
    %cst_54 = arith.constant 1.000000e+00 : f32
    %132 = vector.broadcast %cst_54 : f32 to vector<2x128xf32>
    %133 = arith.addf %132, %131 : vector<2x128xf32>
    %134 = arith.divf %132, %133 : vector<2x128xf32>
    %135 = math.tanh %129 : vector<2x128xf32>
    %136 = vector.extract_strided_slice %134 {offsets = [0, 0], sizes = [2, 32], strides = [1, 1]} : vector<2x128xf32> to vector<2x32xf32>
    %137 = vector.extract_strided_slice %134 {offsets = [0, 32], sizes = [2, 32], strides = [1, 1]} : vector<2x128xf32> to vector<2x32xf32>
    %138 = vector.extract_strided_slice %135 {offsets = [0, 64], sizes = [2, 32], strides = [1, 1]} : vector<2x128xf32> to vector<2x32xf32>
    %139 = vector.extract_strided_slice %134 {offsets = [0, 96], sizes = [2, 32], strides = [1, 1]} : vector<2x128xf32> to vector<2x32xf32>
    %140 = arith.mulf %137, %104 : vector<2x32xf32>
    %141 = arith.mulf %136, %138 : vector<2x32xf32>
    %142 = arith.addf %140, %141 : vector<2x32xf32>
    %143 = math.tanh %142 : vector<2x32xf32>
    %144 = arith.mulf %139, %143 : vector<2x32xf32>
    %c0_55 = arith.constant 0 : index
    %c3_56 = arith.constant 3 : index
    %145 = memref.load %arg4[%c0_55, %c3_56] : memref<4x8xf32, #tpu.memory_space<smem>>
    %146 = vector.broadcast %145 : f32 to vector<2x32xf32>
    %147 = arith.mulf %146, %144 : vector<2x32xf32>
    %148 = arith.addf %110, %147 : vector<2x32xf32>
    %c1_57 = arith.constant 1 : index
    %c3_58 = arith.constant 3 : index
    %149 = memref.load %arg4[%c1_57, %c3_58] : memref<4x8xf32, #tpu.memory_space<smem>>
    %150 = vector.broadcast %149 : f32 to vector<2x32xf32>
    %151 = arith.mulf %150, %144 : vector<2x32xf32>
    %152 = arith.addf %114, %151 : vector<2x32xf32>
    %c2_59 = arith.constant 2 : index
    %c3_60 = arith.constant 3 : index
    %153 = memref.load %arg4[%c2_59, %c3_60] : memref<4x8xf32, #tpu.memory_space<smem>>
    %154 = vector.broadcast %153 : f32 to vector<2x32xf32>
    %155 = arith.mulf %154, %144 : vector<2x32xf32>
    %156 = arith.addf %118, %155 : vector<2x32xf32>
    %c3_61 = arith.constant 3 : index
    %c3_62 = arith.constant 3 : index
    %157 = memref.load %arg4[%c3_61, %c3_62] : memref<4x8xf32, #tpu.memory_space<smem>>
    %158 = vector.broadcast %157 : f32 to vector<2x32xf32>
    %159 = arith.mulf %158, %144 : vector<2x32xf32>
    %160 = arith.addf %122, %159 : vector<2x32xf32>
    %c0_63 = arith.constant 0 : index
    %c4 = arith.constant 4 : index
    %c0_64 = arith.constant 0 : index
    %161 = vector.load %arg0[%c0_63, %c4, %c0_64] : memref<2x8x32xf32, #tpu.memory_space<vmem>>, vector<2x1x32xf32>
    %162 = vector.shape_cast %161 : vector<2x1x32xf32> to vector<2x32xf32>
    %cst_65 = arith.constant dense<0.000000e+00> : vector<2x128xf32>
    %163 = tpu.matmul %162, %0, %cst_65 {dimension_numbers = #tpu.dot_dimension_numbers<[1], [0], [0], [1], [0, 0, 1, 1], [], []>} : vector<2x32xf32>, vector<32x128xf32>, vector<2x128xf32> -> vector<2x128xf32>
    %cst_66 = arith.constant dense<0.000000e+00> : vector<2x128xf32>
    %164 = tpu.matmul %144, %1, %cst_66 {dimension_numbers = #tpu.dot_dimension_numbers<[1], [0], [0], [1], [0, 0, 1, 1], [], []>} : vector<2x32xf32>, vector<32x128xf32>, vector<2x128xf32> -> vector<2x128xf32>
    %165 = arith.addf %163, %164 : vector<2x128xf32>
    %166 = vector.broadcast %2 : vector<1x128xf32> to vector<2x128xf32>
    %167 = arith.addf %165, %166 : vector<2x128xf32>
    %168 = arith.negf %167 : vector<2x128xf32>
    %169 = math.exp %168 : vector<2x128xf32>
    %cst_67 = arith.constant 1.000000e+00 : f32
    %170 = vector.broadcast %cst_67 : f32 to vector<2x128xf32>
    %171 = arith.addf %170, %169 : vector<2x128xf32>
    %172 = arith.divf %170, %171 : vector<2x128xf32>
    %173 = math.tanh %167 : vector<2x128xf32>
    %174 = vector.extract_strided_slice %172 {offsets = [0, 0], sizes = [2, 32], strides = [1, 1]} : vector<2x128xf32> to vector<2x32xf32>
    %175 = vector.extract_strided_slice %172 {offsets = [0, 32], sizes = [2, 32], strides = [1, 1]} : vector<2x128xf32> to vector<2x32xf32>
    %176 = vector.extract_strided_slice %173 {offsets = [0, 64], sizes = [2, 32], strides = [1, 1]} : vector<2x128xf32> to vector<2x32xf32>
    %177 = vector.extract_strided_slice %172 {offsets = [0, 96], sizes = [2, 32], strides = [1, 1]} : vector<2x128xf32> to vector<2x32xf32>
    %178 = arith.mulf %175, %142 : vector<2x32xf32>
    %179 = arith.mulf %174, %176 : vector<2x32xf32>
    %180 = arith.addf %178, %179 : vector<2x32xf32>
    %181 = math.tanh %180 : vector<2x32xf32>
    %182 = arith.mulf %177, %181 : vector<2x32xf32>
    %c0_68 = arith.constant 0 : index
    %c4_69 = arith.constant 4 : index
    %183 = memref.load %arg4[%c0_68, %c4_69] : memref<4x8xf32, #tpu.memory_space<smem>>
    %184 = vector.broadcast %183 : f32 to vector<2x32xf32>
    %185 = arith.mulf %184, %182 : vector<2x32xf32>
    %186 = arith.addf %148, %185 : vector<2x32xf32>
    %c1_70 = arith.constant 1 : index
    %c4_71 = arith.constant 4 : index
    %187 = memref.load %arg4[%c1_70, %c4_71] : memref<4x8xf32, #tpu.memory_space<smem>>
    %188 = vector.broadcast %187 : f32 to vector<2x32xf32>
    %189 = arith.mulf %188, %182 : vector<2x32xf32>
    %190 = arith.addf %152, %189 : vector<2x32xf32>
    %c2_72 = arith.constant 2 : index
    %c4_73 = arith.constant 4 : index
    %191 = memref.load %arg4[%c2_72, %c4_73] : memref<4x8xf32, #tpu.memory_space<smem>>
    %192 = vector.broadcast %191 : f32 to vector<2x32xf32>
    %193 = arith.mulf %192, %182 : vector<2x32xf32>
    %194 = arith.addf %156, %193 : vector<2x32xf32>
    %c3_74 = arith.constant 3 : index
    %c4_75 = arith.constant 4 : index
    %195 = memref.load %arg4[%c3_74, %c4_75] : memref<4x8xf32, #tpu.memory_space<smem>>
    %196 = vector.broadcast %195 : f32 to vector<2x32xf32>
    %197 = arith.mulf %196, %182 : vector<2x32xf32>
    %198 = arith.addf %160, %197 : vector<2x32xf32>
    %c0_76 = arith.constant 0 : index
    %c5 = arith.constant 5 : index
    %c0_77 = arith.constant 0 : index
    %199 = vector.load %arg0[%c0_76, %c5, %c0_77] : memref<2x8x32xf32, #tpu.memory_space<vmem>>, vector<2x1x32xf32>
    %200 = vector.shape_cast %199 : vector<2x1x32xf32> to vector<2x32xf32>
    %cst_78 = arith.constant dense<0.000000e+00> : vector<2x128xf32>
    %201 = tpu.matmul %200, %0, %cst_78 {dimension_numbers = #tpu.dot_dimension_numbers<[1], [0], [0], [1], [0, 0, 1, 1], [], []>} : vector<2x32xf32>, vector<32x128xf32>, vector<2x128xf32> -> vector<2x128xf32>
    %cst_79 = arith.constant dense<0.000000e+00> : vector<2x128xf32>
    %202 = tpu.matmul %182, %1, %cst_79 {dimension_numbers = #tpu.dot_dimension_numbers<[1], [0], [0], [1], [0, 0, 1, 1], [], []>} : vector<2x32xf32>, vector<32x128xf32>, vector<2x128xf32> -> vector<2x128xf32>
    %203 = arith.addf %201, %202 : vector<2x128xf32>
    %204 = vector.broadcast %2 : vector<1x128xf32> to vector<2x128xf32>
    %205 = arith.addf %203, %204 : vector<2x128xf32>
    %206 = arith.negf %205 : vector<2x128xf32>
    %207 = math.exp %206 : vector<2x128xf32>
    %cst_80 = arith.constant 1.000000e+00 : f32
    %208 = vector.broadcast %cst_80 : f32 to vector<2x128xf32>
    %209 = arith.addf %208, %207 : vector<2x128xf32>
    %210 = arith.divf %208, %209 : vector<2x128xf32>
    %211 = math.tanh %205 : vector<2x128xf32>
    %212 = vector.extract_strided_slice %210 {offsets = [0, 0], sizes = [2, 32], strides = [1, 1]} : vector<2x128xf32> to vector<2x32xf32>
    %213 = vector.extract_strided_slice %210 {offsets = [0, 32], sizes = [2, 32], strides = [1, 1]} : vector<2x128xf32> to vector<2x32xf32>
    %214 = vector.extract_strided_slice %211 {offsets = [0, 64], sizes = [2, 32], strides = [1, 1]} : vector<2x128xf32> to vector<2x32xf32>
    %215 = vector.extract_strided_slice %210 {offsets = [0, 96], sizes = [2, 32], strides = [1, 1]} : vector<2x128xf32> to vector<2x32xf32>
    %216 = arith.mulf %213, %180 : vector<2x32xf32>
    %217 = arith.mulf %212, %214 : vector<2x32xf32>
    %218 = arith.addf %216, %217 : vector<2x32xf32>
    %219 = math.tanh %218 : vector<2x32xf32>
    %220 = arith.mulf %215, %219 : vector<2x32xf32>
    %c0_81 = arith.constant 0 : index
    %c5_82 = arith.constant 5 : index
    %221 = memref.load %arg4[%c0_81, %c5_82] : memref<4x8xf32, #tpu.memory_space<smem>>
    %222 = vector.broadcast %221 : f32 to vector<2x32xf32>
    %223 = arith.mulf %222, %220 : vector<2x32xf32>
    %224 = arith.addf %186, %223 : vector<2x32xf32>
    %c1_83 = arith.constant 1 : index
    %c5_84 = arith.constant 5 : index
    %225 = memref.load %arg4[%c1_83, %c5_84] : memref<4x8xf32, #tpu.memory_space<smem>>
    %226 = vector.broadcast %225 : f32 to vector<2x32xf32>
    %227 = arith.mulf %226, %220 : vector<2x32xf32>
    %228 = arith.addf %190, %227 : vector<2x32xf32>
    %c2_85 = arith.constant 2 : index
    %c5_86 = arith.constant 5 : index
    %229 = memref.load %arg4[%c2_85, %c5_86] : memref<4x8xf32, #tpu.memory_space<smem>>
    %230 = vector.broadcast %229 : f32 to vector<2x32xf32>
    %231 = arith.mulf %230, %220 : vector<2x32xf32>
    %232 = arith.addf %194, %231 : vector<2x32xf32>
    %c3_87 = arith.constant 3 : index
    %c5_88 = arith.constant 5 : index
    %233 = memref.load %arg4[%c3_87, %c5_88] : memref<4x8xf32, #tpu.memory_space<smem>>
    %234 = vector.broadcast %233 : f32 to vector<2x32xf32>
    %235 = arith.mulf %234, %220 : vector<2x32xf32>
    %236 = arith.addf %198, %235 : vector<2x32xf32>
    %c0_89 = arith.constant 0 : index
    %c6 = arith.constant 6 : index
    %c0_90 = arith.constant 0 : index
    %237 = vector.load %arg0[%c0_89, %c6, %c0_90] : memref<2x8x32xf32, #tpu.memory_space<vmem>>, vector<2x1x32xf32>
    %238 = vector.shape_cast %237 : vector<2x1x32xf32> to vector<2x32xf32>
    %cst_91 = arith.constant dense<0.000000e+00> : vector<2x128xf32>
    %239 = tpu.matmul %238, %0, %cst_91 {dimension_numbers = #tpu.dot_dimension_numbers<[1], [0], [0], [1], [0, 0, 1, 1], [], []>} : vector<2x32xf32>, vector<32x128xf32>, vector<2x128xf32> -> vector<2x128xf32>
    %cst_92 = arith.constant dense<0.000000e+00> : vector<2x128xf32>
    %240 = tpu.matmul %220, %1, %cst_92 {dimension_numbers = #tpu.dot_dimension_numbers<[1], [0], [0], [1], [0, 0, 1, 1], [], []>} : vector<2x32xf32>, vector<32x128xf32>, vector<2x128xf32> -> vector<2x128xf32>
    %241 = arith.addf %239, %240 : vector<2x128xf32>
    %242 = vector.broadcast %2 : vector<1x128xf32> to vector<2x128xf32>
    %243 = arith.addf %241, %242 : vector<2x128xf32>
    %244 = arith.negf %243 : vector<2x128xf32>
    %245 = math.exp %244 : vector<2x128xf32>
    %cst_93 = arith.constant 1.000000e+00 : f32
    %246 = vector.broadcast %cst_93 : f32 to vector<2x128xf32>
    %247 = arith.addf %246, %245 : vector<2x128xf32>
    %248 = arith.divf %246, %247 : vector<2x128xf32>
    %249 = math.tanh %243 : vector<2x128xf32>
    %250 = vector.extract_strided_slice %248 {offsets = [0, 0], sizes = [2, 32], strides = [1, 1]} : vector<2x128xf32> to vector<2x32xf32>
    %251 = vector.extract_strided_slice %248 {offsets = [0, 32], sizes = [2, 32], strides = [1, 1]} : vector<2x128xf32> to vector<2x32xf32>
    %252 = vector.extract_strided_slice %249 {offsets = [0, 64], sizes = [2, 32], strides = [1, 1]} : vector<2x128xf32> to vector<2x32xf32>
    %253 = vector.extract_strided_slice %248 {offsets = [0, 96], sizes = [2, 32], strides = [1, 1]} : vector<2x128xf32> to vector<2x32xf32>
    %254 = arith.mulf %251, %218 : vector<2x32xf32>
    %255 = arith.mulf %250, %252 : vector<2x32xf32>
    %256 = arith.addf %254, %255 : vector<2x32xf32>
    %257 = math.tanh %256 : vector<2x32xf32>
    %258 = arith.mulf %253, %257 : vector<2x32xf32>
    %c0_94 = arith.constant 0 : index
    %c6_95 = arith.constant 6 : index
    %259 = memref.load %arg4[%c0_94, %c6_95] : memref<4x8xf32, #tpu.memory_space<smem>>
    %260 = vector.broadcast %259 : f32 to vector<2x32xf32>
    %261 = arith.mulf %260, %258 : vector<2x32xf32>
    %262 = arith.addf %224, %261 : vector<2x32xf32>
    %c1_96 = arith.constant 1 : index
    %c6_97 = arith.constant 6 : index
    %263 = memref.load %arg4[%c1_96, %c6_97] : memref<4x8xf32, #tpu.memory_space<smem>>
    %264 = vector.broadcast %263 : f32 to vector<2x32xf32>
    %265 = arith.mulf %264, %258 : vector<2x32xf32>
    %266 = arith.addf %228, %265 : vector<2x32xf32>
    %c2_98 = arith.constant 2 : index
    %c6_99 = arith.constant 6 : index
    %267 = memref.load %arg4[%c2_98, %c6_99] : memref<4x8xf32, #tpu.memory_space<smem>>
    %268 = vector.broadcast %267 : f32 to vector<2x32xf32>
    %269 = arith.mulf %268, %258 : vector<2x32xf32>
    %270 = arith.addf %232, %269 : vector<2x32xf32>
    %c3_100 = arith.constant 3 : index
    %c6_101 = arith.constant 6 : index
    %271 = memref.load %arg4[%c3_100, %c6_101] : memref<4x8xf32, #tpu.memory_space<smem>>
    %272 = vector.broadcast %271 : f32 to vector<2x32xf32>
    %273 = arith.mulf %272, %258 : vector<2x32xf32>
    %274 = arith.addf %236, %273 : vector<2x32xf32>
    %c0_102 = arith.constant 0 : index
    %c7 = arith.constant 7 : index
    %c0_103 = arith.constant 0 : index
    %275 = vector.load %arg0[%c0_102, %c7, %c0_103] : memref<2x8x32xf32, #tpu.memory_space<vmem>>, vector<2x1x32xf32>
    %276 = vector.shape_cast %275 : vector<2x1x32xf32> to vector<2x32xf32>
    %cst_104 = arith.constant dense<0.000000e+00> : vector<2x128xf32>
    %277 = tpu.matmul %276, %0, %cst_104 {dimension_numbers = #tpu.dot_dimension_numbers<[1], [0], [0], [1], [0, 0, 1, 1], [], []>} : vector<2x32xf32>, vector<32x128xf32>, vector<2x128xf32> -> vector<2x128xf32>
    %cst_105 = arith.constant dense<0.000000e+00> : vector<2x128xf32>
    %278 = tpu.matmul %258, %1, %cst_105 {dimension_numbers = #tpu.dot_dimension_numbers<[1], [0], [0], [1], [0, 0, 1, 1], [], []>} : vector<2x32xf32>, vector<32x128xf32>, vector<2x128xf32> -> vector<2x128xf32>
    %279 = arith.addf %277, %278 : vector<2x128xf32>
    %280 = vector.broadcast %2 : vector<1x128xf32> to vector<2x128xf32>
    %281 = arith.addf %279, %280 : vector<2x128xf32>
    %282 = arith.negf %281 : vector<2x128xf32>
    %283 = math.exp %282 : vector<2x128xf32>
    %cst_106 = arith.constant 1.000000e+00 : f32
    %284 = vector.broadcast %cst_106 : f32 to vector<2x128xf32>
    %285 = arith.addf %284, %283 : vector<2x128xf32>
    %286 = arith.divf %284, %285 : vector<2x128xf32>
    %287 = math.tanh %281 : vector<2x128xf32>
    %288 = vector.extract_strided_slice %286 {offsets = [0, 0], sizes = [2, 32], strides = [1, 1]} : vector<2x128xf32> to vector<2x32xf32>
    %289 = vector.extract_strided_slice %286 {offsets = [0, 32], sizes = [2, 32], strides = [1, 1]} : vector<2x128xf32> to vector<2x32xf32>
    %290 = vector.extract_strided_slice %287 {offsets = [0, 64], sizes = [2, 32], strides = [1, 1]} : vector<2x128xf32> to vector<2x32xf32>
    %291 = vector.extract_strided_slice %286 {offsets = [0, 96], sizes = [2, 32], strides = [1, 1]} : vector<2x128xf32> to vector<2x32xf32>
    %292 = arith.mulf %289, %256 : vector<2x32xf32>
    %293 = arith.mulf %288, %290 : vector<2x32xf32>
    %294 = arith.addf %292, %293 : vector<2x32xf32>
    %295 = math.tanh %294 : vector<2x32xf32>
    %296 = arith.mulf %291, %295 : vector<2x32xf32>
    %c0_107 = arith.constant 0 : index
    %c7_108 = arith.constant 7 : index
    %297 = memref.load %arg4[%c0_107, %c7_108] : memref<4x8xf32, #tpu.memory_space<smem>>
    %298 = vector.broadcast %297 : f32 to vector<2x32xf32>
    %299 = arith.mulf %298, %296 : vector<2x32xf32>
    %300 = arith.addf %262, %299 : vector<2x32xf32>
    %c1_109 = arith.constant 1 : index
    %c7_110 = arith.constant 7 : index
    %301 = memref.load %arg4[%c1_109, %c7_110] : memref<4x8xf32, #tpu.memory_space<smem>>
    %302 = vector.broadcast %301 : f32 to vector<2x32xf32>
    %303 = arith.mulf %302, %296 : vector<2x32xf32>
    %304 = arith.addf %266, %303 : vector<2x32xf32>
    %c2_111 = arith.constant 2 : index
    %c7_112 = arith.constant 7 : index
    %305 = memref.load %arg4[%c2_111, %c7_112] : memref<4x8xf32, #tpu.memory_space<smem>>
    %306 = vector.broadcast %305 : f32 to vector<2x32xf32>
    %307 = arith.mulf %306, %296 : vector<2x32xf32>
    %308 = arith.addf %270, %307 : vector<2x32xf32>
    %c3_113 = arith.constant 3 : index
    %c7_114 = arith.constant 7 : index
    %309 = memref.load %arg4[%c3_113, %c7_114] : memref<4x8xf32, #tpu.memory_space<smem>>
    %310 = vector.broadcast %309 : f32 to vector<2x32xf32>
    %311 = arith.mulf %310, %296 : vector<2x32xf32>
    %312 = arith.addf %274, %311 : vector<2x32xf32>
    %c0_115 = arith.constant 0 : index
    %313 = memref.load %arg5[%c0_115] : memref<4xf32, #tpu.memory_space<smem>>
    %314 = vector.broadcast %313 : f32 to vector<2x32xf32>
    %315 = arith.addf %300, %314 : vector<2x32xf32>
    %c0_116 = arith.constant 0 : index
    %c0_117 = arith.constant 0 : index
    %c0_118 = arith.constant 0 : index
    %316 = vector.load %arg6[%c0_116, %c0_117, %c0_118] : memref<2x4x32xf32, #tpu.memory_space<vmem>>, vector<2x1x32xf32>
    %317 = vector.shape_cast %316 : vector<2x1x32xf32> to vector<2x32xf32>
    %318 = vector.shape_cast %315 : vector<2x32xf32> to vector<2x1x32xf32>
    tpu.vector_store %arg6[%c0_116, %c0_117, %c0_118], %318 {strides = array<i32>} : memref<2x4x32xf32, #tpu.memory_space<vmem>>, vector<2x1x32xf32>,
    %c1_119 = arith.constant 1 : index
    %319 = memref.load %arg5[%c1_119] : memref<4xf32, #tpu.memory_space<smem>>
    %320 = vector.broadcast %319 : f32 to vector<2x32xf32>
    %321 = arith.addf %304, %320 : vector<2x32xf32>
    %c0_120 = arith.constant 0 : index
    %c1_121 = arith.constant 1 : index
    %c0_122 = arith.constant 0 : index
    %322 = vector.load %arg6[%c0_120, %c1_121, %c0_122] : memref<2x4x32xf32, #tpu.memory_space<vmem>>, vector<2x1x32xf32>
    %323 = vector.shape_cast %322 : vector<2x1x32xf32> to vector<2x32xf32>
    %324 = vector.shape_cast %321 : vector<2x32xf32> to vector<2x1x32xf32>
    tpu.vector_store %arg6[%c0_120, %c1_121, %c0_122], %324 {strides = array<i32>} : memref<2x4x32xf32, #tpu.memory_space<vmem>>, vector<2x1x32xf32>,
    %c2_123 = arith.constant 2 : index
    %325 = memref.load %arg5[%c2_123] : memref<4xf32, #tpu.memory_space<smem>>
    %326 = vector.broadcast %325 : f32 to vector<2x32xf32>
    %327 = arith.addf %308, %326 : vector<2x32xf32>
    %c0_124 = arith.constant 0 : index
    %c2_125 = arith.constant 2 : index
    %c0_126 = arith.constant 0 : index
    %328 = vector.load %arg6[%c0_124, %c2_125, %c0_126] : memref<2x4x32xf32, #tpu.memory_space<vmem>>, vector<2x1x32xf32>
    %329 = vector.shape_cast %328 : vector<2x1x32xf32> to vector<2x32xf32>
    %330 = vector.shape_cast %327 : vector<2x32xf32> to vector<2x1x32xf32>
    tpu.vector_store %arg6[%c0_124, %c2_125, %c0_126], %330 {strides = array<i32>} : memref<2x4x32xf32, #tpu.memory_space<vmem>>, vector<2x1x32xf32>,
    %c3_127 = arith.constant 3 : index
    %331 = memref.load %arg5[%c3_127] : memref<4xf32, #tpu.memory_space<smem>>
    %332 = vector.broadcast %331 : f32 to vector<2x32xf32>
    %333 = arith.addf %312, %332 : vector<2x32xf32>
    %c0_128 = arith.constant 0 : index
    %c3_129 = arith.constant 3 : index
    %c0_130 = arith.constant 0 : index
    %334 = vector.load %arg6[%c0_128, %c3_129, %c0_130] : memref<2x4x32xf32, #tpu.memory_space<vmem>>, vector<2x1x32xf32>
    %335 = vector.shape_cast %334 : vector<2x1x32xf32> to vector<2x32xf32>
    %336 = vector.shape_cast %333 : vector<2x32xf32> to vector<2x1x32xf32>
    tpu.vector_store %arg6[%c0_128, %c3_129, %c0_130], %336 {strides = array<i32>} : memref<2x4x32xf32, #tpu.memory_space<vmem>>, vector<2x1x32xf32>,
    return
  }
}

</mosaic_0001>

<llo_original>
// kernel: model_forward.1
$region0: #{model_forward.1}
  #allocation0 [shape = 'u32[]', space=smem, size = 0x4, offset = 0x4, fixed_abs, tag = 'smem constant byte address 0x4 - core index']
  #allocation1 [shape = 'u32[72,128]{1,0:T(1,128)}', space=vmem, size = 0x9000, scoped, tag = 'internal scratch']
  %s0 = inlined_call_operand.hbm [shape: f32[2,8,32], index: 0, kind: input, shape index: {}]
  %s1 = inlined_call_operand.hbm [shape: f32[32,128], index: 1, kind: input, shape index: {}]
  %s2 = inlined_call_operand.hbm [shape: f32[32,128], index: 2, kind: input, shape index: {}]
  %s3 = inlined_call_operand.vmem [shape: f32[1,128], index: 3, kind: input, shape index: {}]
  %s4 = inlined_call_operand.hbm [shape: f32[4,8], index: 4, kind: input, shape index: {}]
  %s5 = inlined_call_operand.hbm [shape: f32[4], index: 5, kind: input, shape index: {}]
  %s6 = inlined_call_operand.hbm [shape: f32[2,4,32], index: 6, kind: output, shape index: {}]
  %s7 = sld [smem:[#allocation0]]
  $region54: #{model_forward.1} parent=0
    _
  %s9 = ssub.s32 1, %s7
  %s10 = scalar_select 0, %s9, %s7
  $region1: #{model_forward.1} parent=0
    #allocation2 [shape = 'u8[8192]{0}', space=vmem, size = 0x2000, scoped, tag = 'input window, operand 0, single buffered']
    #allocation3 [shape = 's32[1]{0}', space=sflag, size = 0x4, scoped, tag = 'scoped memory for model_forward.1']
    #allocation4 [shape = 's32[1]{0}', space=sflag, size = 0x4, scoped, tag = 'scoped memory for model_forward.1']
    #allocation5 [shape = 's32[1]{0}', space=sflag, size = 0x4, scoped, tag = 'scoped memory for model_forward.1']
    #allocation6 [shape = 'u8[16384]{0}', space=vmem, size = 0x4000, scoped, tag = 'input window, operand 1, single buffered']
    #allocation7 [shape = 's32[1]{0}', space=sflag, size = 0x4, scoped, tag = 'scoped memory for model_forward.1']
    #allocation8 [shape = 'u8[16384]{0}', space=vmem, size = 0x4000, scoped, tag = 'input window, operand 2, single buffered']
    #allocation9 [shape = 'u8[2048]{0}', space=smem, size = 0x800, scoped, tag = 'input window, operand 4, single buffered']
    #allocation10 [shape = 'u8[512]{0}', space=smem, size = 0x200, scoped, tag = 'input window, operand 5, single buffered']
    #allocation11 [shape = 's32[1]{0}', space=sflag, size = 0x4, scoped, tag = 'scoped memory for model_forward.1']
    #allocation12 [shape = 'u8[4096]{0}', space=vmem, size = 0x1000, scoped, tag = 'output window, operand 0, single buffered']
    %11 = vsyncpa [#allocation3], 0
    %12 = vsyncpa [#allocation7], 0
    %13 = vsyncpa [#allocation5], 0
    %14 = vsyncpa [#allocation11], 0
    %15 = vsyncpa [#allocation4], 0
    // Predicated region
    $region2: #{model_forward.1} parent=1 // pred_check
      _
    $region3: #{model_forward.1} parent=1 // pred_check_branch
      %17 = sbr.rel (0) target = $region5
    $region4: #{model_forward.1} parent=1 // pred_region
      %19 = vsyncadd [#allocation3], 0
      %s20 = sshll.u32 %s0, 4
      %s21 = int_to_ptr.hbm [resolvable:$true] %s20
      %s22 = sshll.u32 [#allocation2], 4
      %s23 = int_to_ptr.vmem [resolvable:$true] %s22
      %28 = dma.hbm_to_vmem [thread:$0]  %s21, 256, %s23, [#allocation3], 128, 128, 8
    $region5: #{model_forward.1} parent=1 // pred_fallthru
      _
    // Predicated region
    $region6: #{model_forward.1} parent=1 // pred_check
      _
    $region7: #{model_forward.1} parent=1 // pred_check_branch
      %30 = sbr.rel (0) target = $region9
    $region8: #{model_forward.1} parent=1 // pred_region
      %32 = vsyncadd [#allocation7], 0
      %s33 = sshll.u32 %s1, 4
      %s34 = int_to_ptr.hbm [resolvable:$true] %s33
      %s35 = sshll.u32 [#allocation6], 4
      %s36 = int_to_ptr.vmem [resolvable:$true] %s35
      %41 = dma.hbm_to_vmem [thread:$0]  %s34, 512, %s36, [#allocation7], 128, 128, 8
    $region9: #{model_forward.1} parent=1 // pred_fallthru
      _
    // Predicated region
    $region10: #{model_forward.1} parent=1 // pred_check
      _
    $region11: #{model_forward.1} parent=1 // pred_check_branch
      %43 = sbr.rel (0) target = $region13
    $region12: #{model_forward.1} parent=1 // pred_region
      %45 = vsyncadd [#allocation7], 0
      %s46 = sshll.u32 %s2, 4
      %s47 = int_to_ptr.hbm [resolvable:$true] %s46
      %s48 = sshll.u32 [#allocation8], 4
      %s49 = int_to_ptr.vmem [resolvable:$true] %s48
      %54 = dma.hbm_to_vmem [thread:$0]  %s47, 512, %s49, [#allocation7], 128, 128, 8
    $region13: #{model_forward.1} parent=1 // pred_fallthru
      _
    // Predicated region
    $region14: #{model_forward.1} parent=1 // pred_check
      _
    $region15: #{model_forward.1} parent=1 // pred_check_branch
      %56 = sbr.rel (0) target = $region17
    $region16: #{model_forward.1} parent=1 // pred_region
      _
    $region17: #{model_forward.1} parent=1 // pred_fallthru
      _
    // Predicated region
    $region18: #{model_forward.1} parent=1 // pred_check
      _
    $region19: #{model_forward.1} parent=1 // pred_check_branch
      %58 = sbr.rel (0) target = $region21
    $region20: #{model_forward.1} parent=1 // pred_region
      %60 = vsyncadd [#allocation5], 0
      %s62 = sshll.u32 %s4, 4
      %s63 = int_to_ptr.hbm [resolvable:$true] %s62
      %65 = dma.hbm_to_smem %s63, 64, [#allocation9], [#allocation5]
    $region21: #{model_forward.1} parent=1 // pred_fallthru
      _
    // Predicated region
    $region22: #{model_forward.1} parent=1 // pred_check
      _
    $region23: #{model_forward.1} parent=1 // pred_check_branch
      %67 = sbr.rel (0) target = $region25
    $region24: #{model_forward.1} parent=1 // pred_region
      %69 = vsyncadd [#allocation11], 0
      %s71 = sshll.u32 %s5, 4
      %s72 = int_to_ptr.hbm [resolvable:$true] %s71
      %74 = dma.hbm_to_smem %s72, 16, [#allocation10], [#allocation11]
    $region25: #{model_forward.1} parent=1 // pred_fallthru
      _
    // Predicated region
    $region26: #{model_forward.1} parent=1 // pred_check
      _
    $region27: #{model_forward.1} parent=1 // pred_check_branch
      %76 = sbr.rel (0) target = $region29
    $region28: #{model_forward.1} parent=1 // pred_region
      %78 = dma.done [#allocation3], 256
    $region29: #{model_forward.1} parent=1 // pred_fallthru
      _
    // Predicated region
    $region30: #{model_forward.1} parent=1 // pred_check
      _
    $region31: #{model_forward.1} parent=1 // pred_check_branch
      %80 = sbr.rel (0) target = $region33
    $region32: #{model_forward.1} parent=1 // pred_region
      %82 = dma.done [#allocation7], 512
    $region33: #{model_forward.1} parent=1 // pred_fallthru
      _
    // Predicated region
    $region34: #{model_forward.1} parent=1 // pred_check
      _
    $region35: #{model_forward.1} parent=1 // pred_check_branch
      %84 = sbr.rel (0) target = $region37
    $region36: #{model_forward.1} parent=1 // pred_region
      %86 = dma.done [#allocation7], 512
    $region37: #{model_forward.1} parent=1 // pred_fallthru
      _
    // Predicated region
    $region38: #{model_forward.1} parent=1 // pred_check
      _
    $region39: #{model_forward.1} parent=1 // pred_check_branch
      %88 = sbr.rel (0) target = $region41
    $region40: #{model_forward.1} parent=1 // pred_region
      %90 = dma.done [#allocation5], 64
    $region41: #{model_forward.1} parent=1 // pred_fallthru
      _
    // Predicated region
    $region42: #{model_forward.1} parent=1 // pred_check
      _
    $region43: #{model_forward.1} parent=1 // pred_check_branch
      %92 = sbr.rel (0) target = $region45
    $region44: #{model_forward.1} parent=1 // pred_region
      %94 = dma.done [#allocation11], 16
    $region45: #{model_forward.1} parent=1 // pred_fallthru
      _
    %95 = sfence
    %v96 = vld [vmem:[#allocation6] sm:$0xff]
    %v97 = vld [vmem:[#allocation6 + $0x8] sm:$0xff]
    %v98 = vld [vmem:[#allocation6 + $0x10] sm:$0xff]
    %v99 = vld [vmem:[#allocation6 + $0x18] sm:$0xff]
    %v100 = vld [vmem:[#allocation8] sm:$0xff]
    %v101 = vld [vmem:[#allocation8 + $0x8] sm:$0xff]
    %v102 = vld [vmem:[#allocation8 + $0x10] sm:$0xff]
    %v103 = vld [vmem:[#allocation8 + $0x18] sm:$0xff]
    %v104 = vld [vmem:[%s3] sm:$0x1]
    %v105 = vld [vmem:[#allocation2] sm:$0x1]
    %v106 = vld [vmem:[#allocation2 + $0x8] sm:$0x1]
    %vm107 = vcmask 261120
    %v109 = vsel %vm107, 0.0, 0
    %111 = vmatpush.msra.mxu0 0.0
    %112 = vmatpush.msra.mxu0 0.0
    %113 = vmatpush.msra.mxu0 0.0
    %114 = vmatpush.msra.mxu0 0.0
    %115 = vmatpush.msra.mxu0 0.0
    %116 = vmatpush.msra.mxu0 0.0
    %117 = vmatpush.msra.mxu0 0.0
    %118 = vmatpush.msra.mxu0 0.0
    %119 = vmatpush.msra.mxu0 0.0
    %120 = vmatpush.msra.mxu0 0.0
    %121 = vmatpush.msra.mxu0 0.0
    %122 = vmatpush.msra.mxu0 0.0
    %123 = vmatpush.msra.mxu0 %v103
    %124 = vmatpush.msra.mxu0 %v102
    %125 = vmatpush.msra.mxu0 %v101
    %126 = vmatpush.msra.mxu0 %v100
    %127 = vmatmul.f32.gmra.mxu0 %v109
    %v128 = vpop.f32.mrf.mxu0
    %v129 = vadd.f32 0.0, %v128
    %130 = vdwg.mxu0
    %v133 = vrot.slane %v106, 7
    %vm134 = vcmask 1041409
    %v135 = vsel %vm134, %v133, %v105
    %v136 = vsel %vm107, %v135, 0
    %138 = vmatpush.msra.mxu0 0.0
    %139 = vmatpush.msra.mxu0 0.0
    %140 = vmatpush.msra.mxu0 0.0
    %141 = vmatpush.msra.mxu0 0.0
    %142 = vmatpush.msra.mxu0 0.0
    %143 = vmatpush.msra.mxu0 0.0
    %144 = vmatpush.msra.mxu0 0.0
    %145 = vmatpush.msra.mxu0 0.0
    %146 = vmatpush.msra.mxu0 0.0
    %147 = vmatpush.msra.mxu0 0.0
    %148 = vmatpush.msra.mxu0 0.0
    %149 = vmatpush.msra.mxu0 0.0
    %150 = vmatpush.msra.mxu0 %v99
    %151 = vmatpush.msra.mxu0 %v98
    %152 = vmatpush.msra.mxu0 %v97
    %153 = vmatpush.msra.mxu0 %v96
    %154 = vmatmul.f32.gmra.mxu0 %v136
    %v155 = vpop.f32.mrf.mxu0
    %v156 = vadd.f32 %v129, %v155
    %157 = vdwg.mxu0
    %v159 = vperm.slane %v104, 0
    %v161 = vadd.f32 %v156, %v159
    %v162 = vxor.u32 %v161, 2147483648
    %v163 = vmul.f32 %v162, 1.442695
    %v164 = vpow.pop %v163
    %v165 = vadd.f32 %v164, 1.0
    %v166 = vrcp.pop %v165
    %v167 = vmul.f32 %v165, %v166
    %v168 = vsub.f32 1.0, %v167
    %v169 = vmul.f32 %v166, %v168
    %v170 = vadd.f32 %v166, %v169
    %vm171 = vweird.f32 %v165
    %vm172 = vweird.f32 %v166
    %vm173 = vmor %vm171, %vm172
    %v174 = vsel %vm173, %v166, %v170
    %v175 = vand.u32 2147483647, %v165
    %vm176 = vcmp.eq.f32.partialorder %v175, 8.507059e+37
    %v177 = vand.u32 %v165, 2147483648
    %v178 = vor.u32 1.1754944e-38, %v177
    %v179 = vsel %vm176, %v178, %v174
    %v180 = vmul.f32 1.0, %v179
    %v181 = vtanh.pop %v161
    %v182 = vmul.f32 %v180, 0.0
    %184 = vrot.lane.b32.xlu0 %v181, 64
    %v185 = vpop.permute.xlu0 %184
    %v187 = vmul.f32 %v180, %v185
    %189 = vrot.lane.b32.xlu0 %v187, 32
    %v190 = vpop.permute.xlu0 %189
    %v192 = vadd.f32 %v182, %v190
    %v193 = vtanh.pop %v192
    %195 = vrot.lane.b32.xlu0 %v193, 64
    %v196 = vpop.permute.xlu0 %195
    %v198 = vmul.f32 %v180, %v196
    %s199 = sld [smem:[#allocation9]]
    %v200 = vstv %s199
    %v201 = vmul.f32 %v200, %v198
    %v202 = vadd.f32 %v201, 0.0
    %s203 = sld [smem:[#allocation9 + $0x80]]
    %v204 = vstv %s203
    %v205 = vmul.f32 %v204, %v198
    %v206 = vadd.f32 %v205, 0.0
    %s207 = sld [smem:[#allocation9 + $0x100]]
    %v208 = vstv %s207
    %v209 = vmul.f32 %v208, %v198
    %v210 = vadd.f32 %v209, 0.0
    %s211 = sld [smem:[#allocation9 + $0x180]]
    %v212 = vstv %s211
    %v213 = vmul.f32 %v212, %v198
    %v214 = vadd.f32 %v213, 0.0
    %v215 = vld [vmem:[#allocation2 + $0x1] sm:$0x1]
    %v216 = vld [vmem:[#allocation2 + $0x9] sm:$0x1]
    %218 = vrot.lane.b32.xlu0 %v198, 32
    %v219 = vpop.permute.xlu0 %218
    %v220 = vsel %vm107, %v219, 0
    %222 = vmatpush.msra.mxu0 0.0
    %223 = vmatpush.msra.mxu0 0.0
    %224 = vmatpush.msra.mxu0 0.0
    %225 = vmatpush.msra.mxu0 0.0
    %226 = vmatpush.msra.mxu0 0.0
    %227 = vmatpush.msra.mxu0 0.0
    %228 = vmatpush.msra.mxu0 0.0
    %229 = vmatpush.msra.mxu0 0.0
    %230 = vmatpush.msra.mxu0 0.0
    %231 = vmatpush.msra.mxu0 0.0
    %232 = vmatpush.msra.mxu0 0.0
    %233 = vmatpush.msra.mxu0 0.0
    %234 = vmatpush.msra.mxu0 %v103
    %235 = vmatpush.msra.mxu0 %v102
    %236 = vmatpush.msra.mxu0 %v101
    %237 = vmatpush.msra.mxu0 %v100
    %238 = vmatmul.f32.gmra.mxu0 %v220
    %v239 = vpop.f32.mrf.mxu0
    %v240 = vadd.f32 0.0, %v239
    %241 = vdwg.mxu0
    %v244 = vrot.slane %v216, 7
    %v245 = vsel %vm134, %v244, %v215
    %v246 = vsel %vm107, %v245, 0
    %248 = vmatpush.msra.mxu0 0.0
    %249 = vmatpush.msra.mxu0 0.0
    %250 = vmatpush.msra.mxu0 0.0
    %251 = vmatpush.msra.mxu0 0.0
    %252 = vmatpush.msra.mxu0 0.0
    %253 = vmatpush.msra.mxu0 0.0
    %254 = vmatpush.msra.mxu0 0.0
    %255 = vmatpush.msra.mxu0 0.0
    %256 = vmatpush.msra.mxu0 0.0
    %257 = vmatpush.msra.mxu0 0.0
    %258 = vmatpush.msra.mxu0 0.0
    %259 = vmatpush.msra.mxu0 0.0
    %260 = vmatpush.msra.mxu0 %v99
    %261 = vmatpush.msra.mxu0 %v98
    %262 = vmatpush.msra.mxu0 %v97
    %263 = vmatpush.msra.mxu0 %v96
    %264 = vmatmul.f32.gmra.mxu0 %v246
    %v265 = vpop.f32.mrf.mxu0
    %v266 = vadd.f32 %v240, %v265
    %267 = vdwg.mxu0
    %v268 = vadd.f32 %v266, %v159
    %v269 = vxor.u32 %v268, 2147483648
    %v270 = vmul.f32 %v269, 1.442695
    %v271 = vpow.pop %v270
    %v272 = vadd.f32 %v271, 1.0
    %v273 = vrcp.pop %v272
    %v274 = vmul.f32 %v272, %v273
    %v275 = vsub.f32 1.0, %v274
    %v276 = vmul.f32 %v273, %v275
    %v277 = vadd.f32 %v273, %v276
    %vm278 = vweird.f32 %v272
    %vm279 = vweird.f32 %v273
    %vm280 = vmor %vm278, %vm279
    %v281 = vsel %vm280, %v273, %v277
    %v282 = vand.u32 2147483647, %v272
    %vm283 = vcmp.eq.f32.partialorder %v282, 8.507059e+37
    %v284 = vand.u32 %v272, 2147483648
    %v285 = vor.u32 1.1754944e-38, %v284
    %v286 = vsel %vm283, %v285, %v281
    %v287 = vmul.f32 1.0, %v286
    %v288 = vtanh.pop %v268
    %v289 = vmul.f32 %v287, %v192
    %291 = vrot.lane.b32.xlu0 %v288, 64
    %v292 = vpop.permute.xlu0 %291
    %v294 = vmul.f32 %v287, %v292
    %296 = vrot.lane.b32.xlu0 %v294, 32
    %v297 = vpop.permute.xlu0 %296
    %v299 = vadd.f32 %v289, %v297
    %v300 = vtanh.pop %v299
    %302 = vrot.lane.b32.xlu0 %v300, 64
    %v303 = vpop.permute.xlu0 %302
    %v305 = vmul.f32 %v287, %v303
    %s306 = sld [smem:[#allocation9 + $0x1]]
    %v307 = vstv %s306
    %v308 = vmul.f32 %v307, %v305
    %v309 = vadd.f32 %v202, %v308
    %s310 = sld [smem:[#allocation9 + $0x81]]
    %v311 = vstv %s310
    %v312 = vmul.f32 %v311, %v305
    %v313 = vadd.f32 %v206, %v312
    %s314 = sld [smem:[#allocation9 + $0x101]]
    %v315 = vstv %s314
    %v316 = vmul.f32 %v315, %v305
    %v317 = vadd.f32 %v210, %v316
    %s318 = sld [smem:[#allocation9 + $0x181]]
    %v319 = vstv %s318
    %v320 = vmul.f32 %v319, %v305
    %v321 = vadd.f32 %v214, %v320
    %v322 = vld [vmem:[#allocation2 + $0x2] sm:$0x1]
    %v323 = vld [vmem:[#allocation2 + $0xa] sm:$0x1]
    %325 = vrot.lane.b32.xlu0 %v305, 32
    %v326 = vpop.permute.xlu0 %325
    %v327 = vsel %vm107, %v326, 0
    %329 = vmatpush.msra.mxu0 0.0
    %330 = vmatpush.msra.mxu0 0.0
    %331 = vmatpush.msra.mxu0 0.0
    %332 = vmatpush.msra.mxu0 0.0
    %333 = vmatpush.msra.mxu0 0.0
    %334 = vmatpush.msra.mxu0 0.0
    %335 = vmatpush.msra.mxu0 0.0
    %336 = vmatpush.msra.mxu0 0.0
    %337 = vmatpush.msra.mxu0 0.0
    %338 = vmatpush.msra.mxu0 0.0
    %339 = vmatpush.msra.mxu0 0.0
    %340 = vmatpush.msra.mxu0 0.0
    %341 = vmatpush.msra.mxu0 %v103
    %342 = vmatpush.msra.mxu0 %v102
    %343 = vmatpush.msra.mxu0 %v101
    %344 = vmatpush.msra.mxu0 %v100
    %345 = vmatmul.f32.gmra.mxu0 %v327
    %v346 = vpop.f32.mrf.mxu0
    %v347 = vadd.f32 0.0, %v346
    %348 = vdwg.mxu0
    %v351 = vrot.slane %v323, 7
    %v352 = vsel %vm134, %v351, %v322
    %v353 = vsel %vm107, %v352, 0
    %355 = vmatpush.msra.mxu0 0.0
    %356 = vmatpush.msra.mxu0 0.0
    %357 = vmatpush.msra.mxu0 0.0
    %358 = vmatpush.msra.mxu0 0.0
    %359 = vmatpush.msra.mxu0 0.0
    %360 = vmatpush.msra.mxu0 0.0
    %361 = vmatpush.msra.mxu0 0.0
    %362 = vmatpush.msra.mxu0 0.0
    %363 = vmatpush.msra.mxu0 0.0
    %364 = vmatpush.msra.mxu0 0.0
    %365 = vmatpush.msra.mxu0 0.0
    %366 = vmatpush.msra.mxu0 0.0
    %367 = vmatpush.msra.mxu0 %v99
    %368 = vmatpush.msra.mxu0 %v98
    %369 = vmatpush.msra.mxu0 %v97
    %370 = vmatpush.msra.mxu0 %v96
    %371 = vmatmul.f32.gmra.mxu0 %v353
    %v372 = vpop.f32.mrf.mxu0
    %v373 = vadd.f32 %v347, %v372
    %374 = vdwg.mxu0
    %v375 = vadd.f32 %v373, %v159
    %v376 = vxor.u32 %v375, 2147483648
    %v377 = vmul.f32 %v376, 1.442695
    %v378 = vpow.pop %v377
    %v379 = vadd.f32 %v378, 1.0
    %v380 = vrcp.pop %v379
    %v381 = vmul.f32 %v379, %v380
    %v382 = vsub.f32 1.0, %v381
    %v383 = vmul.f32 %v380, %v382
    %v384 = vadd.f32 %v380, %v383
    %vm385 = vweird.f32 %v379
    %vm386 = vweird.f32 %v380
    %vm387 = vmor %vm385, %vm386
    %v388 = vsel %vm387, %v380, %v384
    %v389 = vand.u32 2147483647, %v379
    %vm390 = vcmp.eq.f32.partialorder %v389, 8.507059e+37
    %v391 = vand.u32 %v379, 2147483648
    %v392 = vor.u32 1.1754944e-38, %v391
    %v393 = vsel %vm390, %v392, %v388
    %v394 = vmul.f32 1.0, %v393
    %v395 = vtanh.pop %v375
    %v396 = vmul.f32 %v394, %v299
    %398 = vrot.lane.b32.xlu0 %v395, 64
    %v399 = vpop.permute.xlu0 %398
    %v401 = vmul.f32 %v394, %v399
    %403 = vrot.lane.b32.xlu0 %v401, 32
    %v404 = vpop.permute.xlu0 %403
    %v406 = vadd.f32 %v396, %v404
    %v407 = vtanh.pop %v406
    %409 = vrot.lane.b32.xlu0 %v407, 64
    %v410 = vpop.permute.xlu0 %409
    %v412 = vmul.f32 %v394, %v410
    %s413 = sld [smem:[#allocation9 + $0x2]]
    %v414 = vstv %s413
    %v415 = vmul.f32 %v414, %v412
    %v416 = vadd.f32 %v309, %v415
    %s417 = sld [smem:[#allocation9 + $0x82]]
    %v418 = vstv %s417
    %v419 = vmul.f32 %v418, %v412
    %v420 = vadd.f32 %v313, %v419
    %s421 = sld [smem:[#allocation9 + $0x102]]
    %v422 = vstv %s421
    %v423 = vmul.f32 %v422, %v412
    %v424 = vadd.f32 %v317, %v423
    %s425 = sld [smem:[#allocation9 + $0x182]]
    %v426 = vstv %s425
    %v427 = vmul.f32 %v426, %v412
    %v428 = vadd.f32 %v321, %v427
    %v429 = vld [vmem:[#allocation2 + $0x3] sm:$0x1]
    %v430 = vld [vmem:[#allocation2 + $0xb] sm:$0x1]
    %432 = vrot.lane.b32.xlu0 %v412, 32
    %v433 = vpop.permute.xlu0 %432
    %v434 = vsel %vm107, %v433, 0
    %436 = vmatpush.msra.mxu0 0.0
    %437 = vmatpush.msra.mxu0 0.0
    %438 = vmatpush.msra.mxu0 0.0
    %439 = vmatpush.msra.mxu0 0.0
    %440 = vmatpush.msra.mxu0 0.0
    %441 = vmatpush.msra.mxu0 0.0
    %442 = vmatpush.msra.mxu0 0.0
    %443 = vmatpush.msra.mxu0 0.0
    %444 = vmatpush.msra.mxu0 0.0
    %445 = vmatpush.msra.mxu0 0.0
    %446 = vmatpush.msra.mxu0 0.0
    %447 = vmatpush.msra.mxu0 0.0
    %448 = vmatpush.msra.mxu0 %v103
    %449 = vmatpush.msra.mxu0 %v102
    %450 = vmatpush.msra.mxu0 %v101
    %451 = vmatpush.msra.mxu0 %v100
    %452 = vmatmul.f32.gmra.mxu0 %v434
    %v453 = vpop.f32.mrf.mxu0
    %v454 = vadd.f32 0.0, %v453
    %455 = vdwg.mxu0
    %v458 = vrot.slane %v430, 7
    %v459 = vsel %vm134, %v458, %v429
    %v460 = vsel %vm107, %v459, 0
    %462 = vmatpush.msra.mxu0 0.0
    %463 = vmatpush.msra.mxu0 0.0
    %464 = vmatpush.msra.mxu0 0.0
    %465 = vmatpush.msra.mxu0 0.0
    %466 = vmatpush.msra.mxu0 0.0
    %467 = vmatpush.msra.mxu0 0.0
    %468 = vmatpush.msra.mxu0 0.0
    %469 = vmatpush.msra.mxu0 0.0
    %470 = vmatpush.msra.mxu0 0.0
    %471 = vmatpush.msra.mxu0 0.0
    %472 = vmatpush.msra.mxu0 0.0
    %473 = vmatpush.msra.mxu0 0.0
    %474 = vmatpush.msra.mxu0 %v99
    %475 = vmatpush.msra.mxu0 %v98
    %476 = vmatpush.msra.mxu0 %v97
    %477 = vmatpush.msra.mxu0 %v96
    %478 = vmatmul.f32.gmra.mxu0 %v460
    %v479 = vpop.f32.mrf.mxu0
    %v480 = vadd.f32 %v454, %v479
    %481 = vdwg.mxu0
    %v482 = vadd.f32 %v480, %v159
    %v483 = vxor.u32 %v482, 2147483648
    %v484 = vmul.f32 %v483, 1.442695
    %v485 = vpow.pop %v484
    %v486 = vadd.f32 %v485, 1.0
    %v487 = vrcp.pop %v486
    %v488 = vmul.f32 %v486, %v487
    %v489 = vsub.f32 1.0, %v488
    %v490 = vmul.f32 %v487, %v489
    %v491 = vadd.f32 %v487, %v490
    %vm492 = vweird.f32 %v486
    %vm493 = vweird.f32 %v487
    %vm494 = vmor %vm492, %vm493
    %v495 = vsel %vm494, %v487, %v491
    %v496 = vand.u32 2147483647, %v486
    %vm497 = vcmp.eq.f32.partialorder %v496, 8.507059e+37
    %v498 = vand.u32 %v486, 2147483648
    %v499 = vor.u32 1.1754944e-38, %v498
    %v500 = vsel %vm497, %v499, %v495
    %v501 = vmul.f32 1.0, %v500
    %v502 = vtanh.pop %v482
    %v503 = vmul.f32 %v501, %v406
    %505 = vrot.lane.b32.xlu0 %v502, 64
    %v506 = vpop.permute.xlu0 %505
    %v508 = vmul.f32 %v501, %v506
    %510 = vrot.lane.b32.xlu0 %v508, 32
    %v511 = vpop.permute.xlu0 %510
    %v513 = vadd.f32 %v503, %v511
    %v514 = vtanh.pop %v513
    %516 = vrot.lane.b32.xlu0 %v514, 64
    %v517 = vpop.permute.xlu0 %516
    %v519 = vmul.f32 %v501, %v517
    %s520 = sld [smem:[#allocation9 + $0x3]]
    %v521 = vstv %s520
    %v522 = vmul.f32 %v521, %v519
    %v523 = vadd.f32 %v416, %v522
    %s524 = sld [smem:[#allocation9 + $0x83]]
    %v525 = vstv %s524
    %v526 = vmul.f32 %v525, %v519
    %v527 = vadd.f32 %v420, %v526
    %s528 = sld [smem:[#allocation9 + $0x103]]
    %v529 = vstv %s528
    %v530 = vmul.f32 %v529, %v519
    %v531 = vadd.f32 %v424, %v530
    %s532 = sld [smem:[#allocation9 + $0x183]]
    %v533 = vstv %s532
    %v534 = vmul.f32 %v533, %v519
    %v535 = vadd.f32 %v428, %v534
    %v536 = vld [vmem:[#allocation2 + $0x4] sm:$0x1]
    %v537 = vld [vmem:[#allocation2 + $0xc] sm:$0x1]
    %539 = vrot.lane.b32.xlu0 %v519, 32
    %v540 = vpop.permute.xlu0 %539
    %v541 = vsel %vm107, %v540, 0
    %543 = vmatpush.msra.mxu0 0.0
    %544 = vmatpush.msra.mxu0 0.0
    %545 = vmatpush.msra.mxu0 0.0
    %546 = vmatpush.msra.mxu0 0.0
    %547 = vmatpush.msra.mxu0 0.0
    %548 = vmatpush.msra.mxu0 0.0
    %549 = vmatpush.msra.mxu0 0.0
    %550 = vmatpush.msra.mxu0 0.0
    %551 = vmatpush.msra.mxu0 0.0
    %552 = vmatpush.msra.mxu0 0.0
    %553 = vmatpush.msra.mxu0 0.0
    %554 = vmatpush.msra.mxu0 0.0
    %555 = vmatpush.msra.mxu0 %v103
    %556 = vmatpush.msra.mxu0 %v102
    %557 = vmatpush.msra.mxu0 %v101
    %558 = vmatpush.msra.mxu0 %v100
    %559 = vmatmul.f32.gmra.mxu0 %v541
    %v560 = vpop.f32.mrf.mxu0
    %v561 = vadd.f32 0.0, %v560
    %562 = vdwg.mxu0
    %v565 = vrot.slane %v537, 7
    %v566 = vsel %vm134, %v565, %v536
    %v567 = vsel %vm107, %v566, 0
    %569 = vmatpush.msra.mxu0 0.0
    %570 = vmatpush.msra.mxu0 0.0
    %571 = vmatpush.msra.mxu0 0.0
    %572 = vmatpush.msra.mxu0 0.0
    %573 = vmatpush.msra.mxu0 0.0
    %574 = vmatpush.msra.mxu0 0.0
    %575 = vmatpush.msra.mxu0 0.0
    %576 = vmatpush.msra.mxu0 0.0
    %577 = vmatpush.msra.mxu0 0.0
    %578 = vmatpush.msra.mxu0 0.0
    %579 = vmatpush.msra.mxu0 0.0
    %580 = vmatpush.msra.mxu0 0.0
    %581 = vmatpush.msra.mxu0 %v99
    %582 = vmatpush.msra.mxu0 %v98
    %583 = vmatpush.msra.mxu0 %v97
    %584 = vmatpush.msra.mxu0 %v96
    %585 = vmatmul.f32.gmra.mxu0 %v567
    %v586 = vpop.f32.mrf.mxu0
    %v587 = vadd.f32 %v561, %v586
    %588 = vdwg.mxu0
    %v589 = vadd.f32 %v587, %v159
    %v590 = vxor.u32 %v589, 2147483648
    %v591 = vmul.f32 %v590, 1.442695
    %v592 = vpow.pop %v591
    %v593 = vadd.f32 %v592, 1.0
    %v594 = vrcp.pop %v593
    %v595 = vmul.f32 %v593, %v594
    %v596 = vsub.f32 1.0, %v595
    %v597 = vmul.f32 %v594, %v596
    %v598 = vadd.f32 %v594, %v597
    %vm599 = vweird.f32 %v593
    %vm600 = vweird.f32 %v594
    %vm601 = vmor %vm599, %vm600
    %v602 = vsel %vm601, %v594, %v598
    %v603 = vand.u32 2147483647, %v593
    %vm604 = vcmp.eq.f32.partialorder %v603, 8.507059e+37
    %v605 = vand.u32 %v593, 2147483648
    %v606 = vor.u32 1.1754944e-38, %v605
    %v607 = vsel %vm604, %v606, %v602
    %v608 = vmul.f32 1.0, %v607
    %v609 = vtanh.pop %v589
    %v610 = vmul.f32 %v608, %v513
    %612 = vrot.lane.b32.xlu0 %v609, 64
    %v613 = vpop.permute.xlu0 %612
    %v615 = vmul.f32 %v608, %v613
    %617 = vrot.lane.b32.xlu0 %v615, 32
    %v618 = vpop.permute.xlu0 %617
    %v620 = vadd.f32 %v610, %v618
    %v621 = vtanh.pop %v620
    %623 = vrot.lane.b32.xlu0 %v621, 64
    %v624 = vpop.permute.xlu0 %623
    %v626 = vmul.f32 %v608, %v624
    %s627 = sld [smem:[#allocation9 + $0x4]]
    %v628 = vstv %s627
    %v629 = vmul.f32 %v628, %v626
    %v630 = vadd.f32 %v523, %v629
    %s631 = sld [smem:[#allocation9 + $0x84]]
    %v632 = vstv %s631
    %v633 = vmul.f32 %v632, %v626
    %v634 = vadd.f32 %v527, %v633
    %s635 = sld [smem:[#allocation9 + $0x104]]
    %v636 = vstv %s635
    %v637 = vmul.f32 %v636, %v626
    %v638 = vadd.f32 %v531, %v637
    %s639 = sld [smem:[#allocation9 + $0x184]]
    %v640 = vstv %s639
    %v641 = vmul.f32 %v640, %v626
    %v642 = vadd.f32 %v535, %v641
    %v643 = vld [vmem:[#allocation2 + $0x5] sm:$0x1]
    %v644 = vld [vmem:[#allocation2 + $0xd] sm:$0x1]
    %646 = vrot.lane.b32.xlu0 %v626, 32
    %v647 = vpop.permute.xlu0 %646
    %v648 = vsel %vm107, %v647, 0
    %650 = vmatpush.msra.mxu0 0.0
    %651 = vmatpush.msra.mxu0 0.0
    %652 = vmatpush.msra.mxu0 0.0
    %653 = vmatpush.msra.mxu0 0.0
    %654 = vmatpush.msra.mxu0 0.0
    %655 = vmatpush.msra.mxu0 0.0
    %656 = vmatpush.msra.mxu0 0.0
    %657 = vmatpush.msra.mxu0 0.0
    %658 = vmatpush.msra.mxu0 0.0
    %659 = vmatpush.msra.mxu0 0.0
    %660 = vmatpush.msra.mxu0 0.0
    %661 = vmatpush.msra.mxu0 0.0
    %662 = vmatpush.msra.mxu0 %v103
    %663 = vmatpush.msra.mxu0 %v102
    %664 = vmatpush.msra.mxu0 %v101
    %665 = vmatpush.msra.mxu0 %v100
    %666 = vmatmul.f32.gmra.mxu0 %v648
    %v667 = vpop.f32.mrf.mxu0
    %v668 = vadd.f32 0.0, %v667
    %669 = vdwg.mxu0
    %v672 = vrot.slane %v644, 7
    %v673 = vsel %vm134, %v672, %v643
    %v674 = vsel %vm107, %v673, 0
    %676 = vmatpush.msra.mxu0 0.0
    %677 = vmatpush.msra.mxu0 0.0
    %678 = vmatpush.msra.mxu0 0.0
    %679 = vmatpush.msra.mxu0 0.0
    %680 = vmatpush.msra.mxu0 0.0
    %681 = vmatpush.msra.mxu0 0.0
    %682 = vmatpush.msra.mxu0 0.0
    %683 = vmatpush.msra.mxu0 0.0
    %684 = vmatpush.msra.mxu0 0.0
    %685 = vmatpush.msra.mxu0 0.0
    %686 = vmatpush.msra.mxu0 0.0
    %687 = vmatpush.msra.mxu0 0.0
    %688 = vmatpush.msra.mxu0 %v99
    %689 = vmatpush.msra.mxu0 %v98
    %690 = vmatpush.msra.mxu0 %v97
    %691 = vmatpush.msra.mxu0 %v96
    %692 = vmatmul.f32.gmra.mxu0 %v674
    %v693 = vpop.f32.mrf.mxu0
    %v694 = vadd.f32 %v668, %v693
    %695 = vdwg.mxu0
    %v696 = vadd.f32 %v694, %v159
    %v697 = vxor.u32 %v696, 2147483648
    %v698 = vmul.f32 %v697, 1.442695
    %v699 = vpow.pop %v698
    %v700 = vadd.f32 %v699, 1.0
    %v701 = vrcp.pop %v700
    %v702 = vmul.f32 %v700, %v701
    %v703 = vsub.f32 1.0, %v702
    %v704 = vmul.f32 %v701, %v703
    %v705 = vadd.f32 %v701, %v704
    %vm706 = vweird.f32 %v700
    %vm707 = vweird.f32 %v701
    %vm708 = vmor %vm706, %vm707
    %v709 = vsel %vm708, %v701, %v705
    %v710 = vand.u32 2147483647, %v700
    %vm711 = vcmp.eq.f32.partialorder %v710, 8.507059e+37
    %v712 = vand.u32 %v700, 2147483648
    %v713 = vor.u32 1.1754944e-38, %v712
    %v714 = vsel %vm711, %v713, %v709
    %v715 = vmul.f32 1.0, %v714
    %v716 = vtanh.pop %v696
    %v717 = vmul.f32 %v715, %v620
    %719 = vrot.lane.b32.xlu0 %v716, 64
    %v720 = vpop.permute.xlu0 %719
    %v722 = vmul.f32 %v715, %v720
    %724 = vrot.lane.b32.xlu0 %v722, 32
    %v725 = vpop.permute.xlu0 %724
    %v727 = vadd.f32 %v717, %v725
    %v728 = vtanh.pop %v727
    %730 = vrot.lane.b32.xlu0 %v728, 64
    %v731 = vpop.permute.xlu0 %730
    %v733 = vmul.f32 %v715, %v731
    %s734 = sld [smem:[#allocation9 + $0x5]]
    %v735 = vstv %s734
    %v736 = vmul.f32 %v735, %v733
    %v737 = vadd.f32 %v630, %v736
    %s738 = sld [smem:[#allocation9 + $0x85]]
    %v739 = vstv %s738
    %v740 = vmul.f32 %v739, %v733
    %v741 = vadd.f32 %v634, %v740
    %s742 = sld [smem:[#allocation9 + $0x105]]
    %v743 = vstv %s742
    %v744 = vmul.f32 %v743, %v733
    %v745 = vadd.f32 %v638, %v744
    %s746 = sld [smem:[#allocation9 + $0x185]]
    %v747 = vstv %s746
    %v748 = vmul.f32 %v747, %v733
    %v749 = vadd.f32 %v642, %v748
    %v750 = vld [vmem:[#allocation2 + $0x6] sm:$0x1]
    %v751 = vld [vmem:[#allocation2 + $0xe] sm:$0x1]
    %753 = vrot.lane.b32.xlu0 %v733, 32
    %v754 = vpop.permute.xlu0 %753
    %v755 = vsel %vm107, %v754, 0
    %757 = vmatpush.msra.mxu0 0.0
    %758 = vmatpush.msra.mxu0 0.0
    %759 = vmatpush.msra.mxu0 0.0
    %760 = vmatpush.msra.mxu0 0.0
    %761 = vmatpush.msra.mxu0 0.0
    %762 = vmatpush.msra.mxu0 0.0
    %763 = vmatpush.msra.mxu0 0.0
    %764 = vmatpush.msra.mxu0 0.0
    %765 = vmatpush.msra.mxu0 0.0
    %766 = vmatpush.msra.mxu0 0.0
    %767 = vmatpush.msra.mxu0 0.0
    %768 = vmatpush.msra.mxu0 0.0
    %769 = vmatpush.msra.mxu0 %v103
    %770 = vmatpush.msra.mxu0 %v102
    %771 = vmatpush.msra.mxu0 %v101
    %772 = vmatpush.msra.mxu0 %v100
    %773 = vmatmul.f32.gmra.mxu0 %v755
    %v774 = vpop.f32.mrf.mxu0
    %v775 = vadd.f32 0.0, %v774
    %776 = vdwg.mxu0
    %v779 = vrot.slane %v751, 7
    %v780 = vsel %vm134, %v779, %v750
    %v781 = vsel %vm107, %v780, 0
    %783 = vmatpush.msra.mxu0 0.0
    %784 = vmatpush.msra.mxu0 0.0
    %785 = vmatpush.msra.mxu0 0.0
    %786 = vmatpush.msra.mxu0 0.0
    %787 = vmatpush.msra.mxu0 0.0
    %788 = vmatpush.msra.mxu0 0.0
    %789 = vmatpush.msra.mxu0 0.0
    %790 = vmatpush.msra.mxu0 0.0
    %791 = vmatpush.msra.mxu0 0.0
    %792 = vmatpush.msra.mxu0 0.0
    %793 = vmatpush.msra.mxu0 0.0
    %794 = vmatpush.msra.mxu0 0.0
    %795 = vmatpush.msra.mxu0 %v99
    %796 = vmatpush.msra.mxu0 %v98
    %797 = vmatpush.msra.mxu0 %v97
    %798 = vmatpush.msra.mxu0 %v96
    %799 = vmatmul.f32.gmra.mxu0 %v781
    %v800 = vpop.f32.mrf.mxu0
    %v801 = vadd.f32 %v775, %v800
    %802 = vdwg.mxu0
    %v803 = vadd.f32 %v801, %v159
    %v804 = vxor.u32 %v803, 2147483648
    %v805 = vmul.f32 %v804, 1.442695
    %v806 = vpow.pop %v805
    %v807 = vadd.f32 %v806, 1.0
    %v808 = vrcp.pop %v807
    %v809 = vmul.f32 %v807, %v808
    %v810 = vsub.f32 1.0, %v809
    %v811 = vmul.f32 %v808, %v810
    %v812 = vadd.f32 %v808, %v811
    %vm813 = vweird.f32 %v807
    %vm814 = vweird.f32 %v808
    %vm815 = vmor %vm813, %vm814
    %v816 = vsel %vm815, %v808, %v812
    %v817 = vand.u32 2147483647, %v807
    %vm818 = vcmp.eq.f32.partialorder %v817, 8.507059e+37
    %v819 = vand.u32 %v807, 2147483648
    %v820 = vor.u32 1.1754944e-38, %v819
    %v821 = vsel %vm818, %v820, %v816
    %v822 = vmul.f32 1.0, %v821
    %v823 = vtanh.pop %v803
    %v824 = vmul.f32 %v822, %v727
    %826 = vrot.lane.b32.xlu0 %v823, 64
    %v827 = vpop.permute.xlu0 %826
    %v829 = vmul.f32 %v822, %v827
    %831 = vrot.lane.b32.xlu0 %v829, 32
    %v832 = vpop.permute.xlu0 %831
    %v834 = vadd.f32 %v824, %v832
    %v835 = vtanh.pop %v834
    %837 = vrot.lane.b32.xlu0 %v835, 64
    %v838 = vpop.permute.xlu0 %837
    %v840 = vmul.f32 %v822, %v838
    %s841 = sld [smem:[#allocation9 + $0x6]]
    %v842 = vstv %s841
    %v843 = vmul.f32 %v842, %v840
    %v844 = vadd.f32 %v737, %v843
    %s845 = sld [smem:[#allocation9 + $0x86]]
    %v846 = vstv %s845
    %v847 = vmul.f32 %v846, %v840
    %v848 = vadd.f32 %v741, %v847
    %s849 = sld [smem:[#allocation9 + $0x106]]
    %v850 = vstv %s849
    %v851 = vmul.f32 %v850, %v840
    %v852 = vadd.f32 %v745, %v851
    %s853 = sld [smem:[#allocation9 + $0x186]]
    %v854 = vstv %s853
    %v855 = vmul.f32 %v854, %v840
    %v856 = vadd.f32 %v749, %v855
    %v857 = vld [vmem:[#allocation2 + $0x7] sm:$0x1]
    %v858 = vld [vmem:[#allocation2 + $0xf] sm:$0x1]
    %860 = vrot.lane.b32.xlu0 %v840, 32
    %v861 = vpop.permute.xlu0 %860
    %v862 = vsel %vm107, %v861, 0
    %864 = vmatpush.msra.mxu0 0.0
    %865 = vmatpush.msra.mxu0 0.0
    %866 = vmatpush.msra.mxu0 0.0
    %867 = vmatpush.msra.mxu0 0.0
    %868 = vmatpush.msra.mxu0 0.0
    %869 = vmatpush.msra.mxu0 0.0
    %870 = vmatpush.msra.mxu0 0.0
    %871 = vmatpush.msra.mxu0 0.0
    %872 = vmatpush.msra.mxu0 0.0
    %873 = vmatpush.msra.mxu0 0.0
    %874 = vmatpush.msra.mxu0 0.0
    %875 = vmatpush.msra.mxu0 0.0
    %876 = vmatpush.msra.mxu0 %v103
    %877 = vmatpush.msra.mxu0 %v102
    %878 = vmatpush.msra.mxu0 %v101
    %879 = vmatpush.msra.mxu0 %v100
    %880 = vmatmul.f32.gmra.mxu0 %v862
    %v881 = vpop.f32.mrf.mxu0
    %v882 = vadd.f32 0.0, %v881
    %883 = vdwg.mxu0
    %v886 = vrot.slane %v858, 7
    %v887 = vsel %vm134, %v886, %v857
    %v888 = vsel %vm107, %v887, 0
    %890 = vmatpush.msra.mxu0 0.0
    %891 = vmatpush.msra.mxu0 0.0
    %892 = vmatpush.msra.mxu0 0.0
    %893 = vmatpush.msra.mxu0 0.0
    %894 = vmatpush.msra.mxu0 0.0
    %895 = vmatpush.msra.mxu0 0.0
    %896 = vmatpush.msra.mxu0 0.0
    %897 = vmatpush.msra.mxu0 0.0
    %898 = vmatpush.msra.mxu0 0.0
    %899 = vmatpush.msra.mxu0 0.0
    %900 = vmatpush.msra.mxu0 0.0
    %901 = vmatpush.msra.mxu0 0.0
    %902 = vmatpush.msra.mxu0 %v99
    %903 = vmatpush.msra.mxu0 %v98
    %904 = vmatpush.msra.mxu0 %v97
    %905 = vmatpush.msra.mxu0 %v96
    %906 = vmatmul.f32.gmra.mxu0 %v888
    %v907 = vpop.f32.mrf.mxu0
    %v908 = vadd.f32 %v882, %v907
    %909 = vdwg.mxu0
    %v910 = vadd.f32 %v908, %v159
    %v911 = vxor.u32 %v910, 2147483648
    %v912 = vmul.f32 %v911, 1.442695
    %v913 = vpow.pop %v912
    %v914 = vadd.f32 %v913, 1.0
    %v915 = vrcp.pop %v914
    %v916 = vmul.f32 %v914, %v915
    %v917 = vsub.f32 1.0, %v916
    %v918 = vmul.f32 %v915, %v917
    %v919 = vadd.f32 %v915, %v918
    %vm920 = vweird.f32 %v914
    %vm921 = vweird.f32 %v915
    %vm922 = vmor %vm920, %vm921
    %v923 = vsel %vm922, %v915, %v919
    %v924 = vand.u32 2147483647, %v914
    %vm925 = vcmp.eq.f32.partialorder %v924, 8.507059e+37
    %v926 = vand.u32 %v914, 2147483648
    %v927 = vor.u32 1.1754944e-38, %v926
    %v928 = vsel %vm925, %v927, %v923
    %v929 = vmul.f32 1.0, %v928
    %v930 = vtanh.pop %v910
    %v931 = vmul.f32 %v929, %v834
    %933 = vrot.lane.b32.xlu0 %v930, 64
    %v934 = vpop.permute.xlu0 %933
    %v936 = vmul.f32 %v929, %v934
    %938 = vrot.lane.b32.xlu0 %v936, 32
    %v939 = vpop.permute.xlu0 %938
    %v941 = vadd.f32 %v931, %v939
    %v942 = vtanh.pop %v941
    %944 = vrot.lane.b32.xlu0 %v942, 64
    %v945 = vpop.permute.xlu0 %944
    %v947 = vmul.f32 %v929, %v945
    %s948 = sld [smem:[#allocation9 + $0x7]]
    %v949 = vstv %s948
    %v950 = vmul.f32 %v949, %v947
    %v951 = vadd.f32 %v844, %v950
    %s952 = sld [smem:[#allocation9 + $0x87]]
    %v953 = vstv %s952
    %v954 = vmul.f32 %v953, %v947
    %v955 = vadd.f32 %v848, %v954
    %s956 = sld [smem:[#allocation9 + $0x107]]
    %v957 = vstv %s956
    %v958 = vmul.f32 %v957, %v947
    %v959 = vadd.f32 %v852, %v958
    %s960 = sld [smem:[#allocation9 + $0x187]]
    %v961 = vstv %s960
    %v962 = vmul.f32 %v961, %v947
    %v963 = vadd.f32 %v856, %v962
    %s964 = sld [smem:[#allocation10]]
    %v965 = vstv %s964
    %v966 = vadd.f32 %v951, %v965
    %v968 = vrot.slane %v966, 1
    %v969 = vperm.slane %v966, 0
    %v970 = vperm.slane %v968, 0
    %971 = vrot.lane.b32.xlu0 %v969, 32
    %v972 = vpop.permute.xlu0 %971
    %973 = vrot.lane.b32.xlu0 %v970, 32
    %v974 = vpop.permute.xlu0 %973
    %vm977 = vcmask 253952
    %978 = vst.msk [vmem:[#allocation12] sm:$0x1] %vm977, %v972
    %979 = vst.msk [vmem:[#allocation12 + $0x4] sm:$0x1] %vm977, %v974
    %s980 = sld [smem:[#allocation10 + $0x1]]
    %v981 = vstv %s980
    %v982 = vadd.f32 %v955, %v981
    %v984 = vrot.slane %v982, 1
    %v985 = vperm.slane %v982, 0
    %v986 = vperm.slane %v984, 0
    %987 = vrot.lane.b32.xlu0 %v985, 32
    %v988 = vpop.permute.xlu0 %987
    %989 = vrot.lane.b32.xlu0 %v986, 32
    %v990 = vpop.permute.xlu0 %989
    %993 = vst.msk [vmem:[#allocation12 + $0x1] sm:$0x1] %vm977, %v988
    %994 = vst.msk [vmem:[#allocation12 + $0x5] sm:$0x1] %vm977, %v990
    %s995 = sld [smem:[#allocation10 + $0x2]]
    %v996 = vstv %s995
    %v997 = vadd.f32 %v959, %v996
    %v999 = vrot.slane %v997, 1
    %v1000 = vperm.slane %v997, 0
    %v1001 = vperm.slane %v999, 0
    %1002 = vrot.lane.b32.xlu0 %v1000, 32
    %v1003 = vpop.permute.xlu0 %1002
    %1004 = vrot.lane.b32.xlu0 %v1001, 32
    %v1005 = vpop.permute.xlu0 %1004
    %1008 = vst.msk [vmem:[#allocation12 + $0x2] sm:$0x1] %vm977, %v1003
    %1009 = vst.msk [vmem:[#allocation12 + $0x6] sm:$0x1] %vm977, %v1005
    %s1010 = sld [smem:[#allocation10 + $0x3]]
    %v1011 = vstv %s1010
    %v1012 = vadd.f32 %v963, %v1011
    %v1014 = vrot.slane %v1012, 1
    %v1015 = vperm.slane %v1012, 0
    %v1016 = vperm.slane %v1014, 0
    %1017 = vrot.lane.b32.xlu0 %v1015, 32
    %v1018 = vpop.permute.xlu0 %1017
    %1019 = vrot.lane.b32.xlu0 %v1016, 32
    %v1020 = vpop.permute.xlu0 %1019
    %1023 = vst.msk [vmem:[#allocation12 + $0x3] sm:$0x1] %vm977, %v1018
    %1024 = vst.msk [vmem:[#allocation12 + $0x7] sm:$0x1] %vm977, %v1020
    // Predicated region
    $region46: #{model_forward.1} parent=1 // pred_check
      _
    $region47: #{model_forward.1} parent=1 // pred_check_branch
      %1026 = sbr.rel (0) target = $region49
    $region48: #{model_forward.1} parent=1 // pred_region
      %1028 = vsyncadd [#allocation4], 0
      %s1029 = sshll.u32 [#allocation12], 4
      %s1030 = int_to_ptr.vmem [resolvable:$true] %s1029
      %s1031 = sshll.u32 %s6, 4
      %s1032 = int_to_ptr.hbm [resolvable:$true] %s1031
      %1037 = dma.vmem_to_hbm [thread:$0]  %s1030, 128, %s1032, [#allocation4], 64, 64, 4
    $region49: #{model_forward.1} parent=1 // pred_fallthru
      _
    // Predicated region
    $region50: #{model_forward.1} parent=1 // pred_check
      _
    $region51: #{model_forward.1} parent=1 // pred_check_branch
      %1039 = sbr.rel (0) target = $region53
    $region52: #{model_forward.1} parent=1 // pred_region
      %1041 = dma.done [#allocation4], 128
    $region53: #{model_forward.1} parent=1 // pred_fallthru
      _
    %1042 = vsyncpa [#allocation3], 1
    %1043 = vsyncpa [#allocation7], 1
    %1044 = vsyncpa [#allocation4], 1
    %1045 = vsyncpa [#allocation5], 1
    %1046 = vsyncpa [#allocation11], 1

</llo_original>
